<compile_context>
chip_gen: v6e
topology: v6e:2x2x1
jax: 0.10.0
libtpu: 0.0.40
codegen_flags: <defaults>
</compile_context>

<pallas_src>
import functools

import jax
import jax.numpy as jnp
from jax.experimental import pallas as pl
from jax.experimental.pallas import tpu as pltpu


def _elu(x):
    # inf-safe ELU; exp(x)-1 on the clamped-negative branch (expm1 has no
    # guaranteed Mosaic lowering; the precision gap is far below the bf16 split).
    return jnp.where(x > 0, x, jnp.exp(jnp.minimum(x, 0.0)) - 1.0)


def _make_gat_forward_kernel(*, alpha: float, nheads: int, nhid: int,
                             nout: int, bb: int, n: int, fin: int):
    """Whole GAT forward (both layers, all heads) for one batch block."""
    NEG_BIG = -9.0e15

    def masked_attention_probs(f1, f2, mask):
        # f1: (bb,n,1), f2: (bb,1,n), mask: (bb,n,n) -> unnormalized probs (f32)
        e = f1 + f2
        e = jnp.where(e > 0, e, alpha * e)                       # LeakyReLU(alpha)
        e = jnp.where(mask, e, jnp.full_like(e, NEG_BIG))
        m = jnp.max(e, axis=-1, keepdims=True)
        return jnp.exp(e - m)                                    # masked entries -> 0

    def av_normalized(p, Wh):
        # Fold the softmax denominator into the AV matmul: one bf16 MXU pass
        # produces [p @ Wh, rowsum(p)]; normalize with one reciprocal per row
        # instead of N^2 per-element divides.
        f = Wh.shape[-1]
        ones_col = jnp.ones((bb, n, 1), jnp.bfloat16)
        Wh_aug = jnp.concatenate([Wh.astype(jnp.bfloat16), ones_col], axis=-1)
        pv = jnp.einsum('bqk,bkf->bqf', p.astype(jnp.bfloat16), Wh_aug,
                        preferred_element_type=jnp.float32)      # (bb,n,f+1)
        # approx=False keeps numerics tight; flip to approx=True (EUP slot)
        # when VALU-bound at large N and re-validate tolerances.
        inv = pl.reciprocal(pv[:, :, f:f + 1], approx=False)
        return pv[:, :, :f] * inv

    def kernel(x_ref, adj_ref, w_all_ref, a1blk_ref, a2_ref,
               w_out_ref, a1o_ref, a2o_ref, o_ref):
        mask = adj_ref[...] > 0.0                                # (bb,n,n) bool

        # ---- layer 1: one batch-folded bf16 projection for all heads ----
        x2 = x_ref[...].reshape(bb * n, fin).astype(jnp.bfloat16)
        Wh_all = jnp.dot(x2, w_all_ref[...],
                         preferred_element_type=jnp.float32)     # (bb*n, H*nhid) f32
        # f1 halves of the attention logits for every head: one block-diagonal
        # MXU matmul instead of per-head VALU lane reductions.
        f1_all = jnp.dot(Wh_all, a1blk_ref[...],
                         preferred_element_type=jnp.float32)     # (bb*n, H)
        f1_all = f1_all.reshape(bb, n, nheads)

        A2 = a2_ref[...]                                         # (H, nhid) f32
        W_out = w_out_ref[...]                                   # (H*nhid, nout) bf16

        # Heads accumulate straight into the layer-2 projection (matmul is
        # linear over the concat): no hidden concat temporary.
        acc = jnp.zeros((bb * n, nout), jnp.float32)
        for hd in range(nheads):                                 # static unroll
            Whh = Wh_all[:, hd * nhid:(hd + 1) * nhid].reshape(bb, n, nhid)
            f1 = f1_all[:, :, hd:hd + 1]                         # (bb,n,1)
            a2b = jnp.broadcast_to(A2[hd].reshape(1, 1, nhid), (bb, 1, nhid))
            f2 = jnp.einsum('bof,bnf->bon', a2b, Whh,
                            preferred_element_type=jnp.float32)  # (bb,1,n)
            p = masked_attention_probs(f1, f2, mask)
            h1 = _elu(av_normalized(p, Whh))                     # concat=True head
            acc = acc + jnp.dot(h1.reshape(bb * n, nhid).astype(jnp.bfloat16),
                                W_out[hd * nhid:(hd + 1) * nhid, :],
                                preferred_element_type=jnp.float32)

        # ---- layer 2 (out_att, concat=False), fused in ----
        Wh2 = acc                                                # (bb*n, nout) f32
        f1o = jnp.dot(Wh2, a1o_ref[...],
                      preferred_element_type=jnp.float32).reshape(bb, n, 1)
        Wh2_3 = Wh2.reshape(bb, n, nout)
        a2ob = jnp.broadcast_to(a2o_ref[...].reshape(1, 1, nout), (bb, 1, nout))
        f2o = jnp.einsum('bof,bnf->bon', a2ob, Wh2_3,
                         preferred_element_type=jnp.float32)     # (bb,1,n)
        p2 = masked_attention_probs(f1o, f2o, mask)
        out = _elu(av_normalized(p2, Wh2_3))                     # GAT.forward elu

        # log_softmax over the feature axis (dim=2), in f32
        mm = jnp.max(out, axis=-1, keepdims=True)
        lse = jnp.log(jnp.sum(jnp.exp(out - mm), axis=-1, keepdims=True)) + mm
        o_ref[...] = (out - lse).astype(o_ref.dtype)

    return kernel


def _vmem_limit_bytes() -> int:
    """Generation-aware VMEM limit (v7x: 64 MiB physical, v5e/v6e: 128 MiB)."""
    try:
        cap = int(getattr(pltpu.get_tpu_info(), "vmem_capacity_bytes", 0))
    except Exception:
        cap = 0
    if cap <= 0:
        cap = 64 * 1024 * 1024                      # conservative (v7x per-TC)
    return min((cap * 3) // 4, 100 * 1024 * 1024)


def _pick_batch_block(B: int, N: int, Fin: int, nheads: int, nhid: int,
                      nout: int, block_budget_bytes: int) -> int:
    """Byte-budgeted picker: accounts for the double-buffered adj/x/out blocks
    and the live (N,N) e/p temporaries, keeps >=2 grid steps (megacore + DMA
    overlap), and prefers bb*N that is a multiple of 128 for the MXU."""
    f32, bf16 = 4, 2
    per_b = (
        2 * N * N * f32                              # adj block, double-buffered
        + 2 * N * Fin * f32                          # x block, double-buffered
        + 2 * N * nout * f32                         # out block, double-buffered
        + N * N * (f32 + f32 + bf16 + 1)             # live e / exp(e) / bf16 p / mask
        + N * nheads * nhid * (f32 + bf16)           # Wh_all + per-head bf16 copy
    )
    max_bb = max(1, block_budget_bytes // max(per_b, 1))
    if B >= 2:
        max_bb = min(max_bb, B // 2)                 # >=2 grid steps
    cands = [c for c in range(1, min(B, int(max_bb)) + 1) if B % c == 0]
    if not cands:
        return 1
    aligned = [c for c in cands if (c * N) % 128 == 0]
    return max(aligned) if aligned else max(cands)


def gat_forward(x, adj, head_params, out_params, *, alpha: float):
    """x: (B, N, Fin) f32, adj: (B, N, N) f32. Eval-mode GAT forward."""
    B, N, Fin = x.shape
    nheads = len(head_params)
    nhid = head_params[0][0].shape[1]
    W_out, a_out = out_params
    nout = W_out.shape[1]

    # Parameter prep (jit constants). adj/x are fed straight through.
    W_all = jnp.concatenate([W for (W, _) in head_params], axis=1).astype(jnp.bfloat16)
    A1_blk = jnp.zeros((nheads * nhid, nheads), jnp.float32)     # block-diag a1 columns
    for h, (_, a) in enumerate(head_params):
        A1_blk = A1_blk.at[h * nhid:(h + 1) * nhid, h].set(a[:nhid, 0])
    a2_all = jnp.stack([a[nhid:, 0] for (_, a) in head_params], axis=0)   # (H, nhid)
    W_out_b = W_out.astype(jnp.bfloat16)
    a1_out = a_out[:nout, 0].reshape(nout, 1).astype(jnp.float32)
    a2_out = a_out[nout:, 0].reshape(1, nout).astype(jnp.float32)

    vmem_limit = _vmem_limit_bytes()
    bb = _pick_batch_block(B, N, Fin, nheads, nhid, nout,
                           block_budget_bytes=(vmem_limit * 3) // 5)
    grid = (B // bb,)

    kernel = _make_gat_forward_kernel(alpha=alpha, nheads=nheads, nhid=nhid,
                                      nout=nout, bb=bb, n=N, fin=Fin)
    return pl.pallas_call(
        kernel,
        out_shape=jax.ShapeDtypeStruct((B, N, nout), jnp.float32),
        grid=grid,
        in_specs=[
            pl.BlockSpec((bb, N, Fin), lambda b: (b, 0, 0)),
            pl.BlockSpec((bb, N, N), lambda b: (b, 0, 0)),
            pl.BlockSpec((Fin, nheads * nhid), lambda b: (0, 0)),
            pl.BlockSpec((nheads * nhid, nheads), lambda b: (0, 0)),
            pl.BlockSpec((nheads, nhid), lambda b: (0, 0)),
            pl.BlockSpec((nheads * nhid, nout), lambda b: (0, 0)),
            pl.BlockSpec((nout, 1), lambda b: (0, 0)),
            pl.BlockSpec((1, nout), lambda b: (0, 0)),
        ],
        out_specs=pl.BlockSpec((bb, N, nout), lambda b: (b, 0, 0)),
        compiler_params=pltpu.CompilerParams(
            dimension_semantics=("parallel",),
            vmem_limit_bytes=vmem_limit,
        ),
    )(x, adj, W_all, A1_blk, a2_all, W_out_b, a1_out, a2_out)


def _gat_reference(x, adj, head_params, out_params, alpha, *, mixed=False):
    """Pure-JAX reference (same math as the PyTorch module, eval mode).
    mixed=True mirrors the kernel's bf16-input / f32-accumulate MXU split so
    the comparison isolates logic errors from the intended precision split."""
    mdt = jnp.bfloat16 if mixed else jnp.float32

    def layer(h, W, a, concat):
        Fout = W.shape[1]
        Wh = jnp.matmul(h.astype(mdt), W.astype(mdt),
                        preferred_element_type=jnp.float32)
        a1, a2 = a[:Fout, 0], a[Fout:, 0]
        e = (Wh @ a1)[:, :, None] + (Wh @ a2)[:, None, :]
        e = jnp.where(e > 0, e, alpha * e)
        e = jnp.where(adj > 0, e, -9.0e15)
        m = jnp.max(e, axis=-1, keepdims=True)
        p = jnp.exp(e - m)
        num = jnp.einsum('bqk,bkf->bqf', p.astype(mdt), Wh.astype(mdt),
                         preferred_element_type=jnp.float32)
        den = jnp.sum(p.astype(mdt).astype(jnp.float32), axis=-1, keepdims=True)
        hp = num / den
        return jax.nn.elu(hp) if concat else hp

    heads = [layer(x, W, a, True) for (W, a) in head_params]
    xc = jnp.concatenate(heads, axis=2)
    W_out, a_out = out_params
    out = jax.nn.elu(layer(xc, W_out, a_out, False))
    return jax.nn.log_softmax(out, axis=-1)


def _xavier_uniform(key, shape, gain=1.414):
    # torch convention for 2-D tensors: fan_in = shape[1], fan_out = shape[0]
    fan_out, fan_in = shape[0], shape[1]
    bound = gain * (6.0 / (fan_in + fan_out)) ** 0.5
    return jax.random.uniform(key, shape, jnp.float32, -bound, bound)


if __name__ == "__main__":
    nfeat, nhid, nout, nheads = 16, 8, 4, 2
    alpha = 0.2            # LeakyReLU slope; dropout unused in eval mode
    B, N = 2, 8

    key = jax.random.PRNGKey(0)
    keys = iter(jax.random.split(key, 4 + 2 * nheads + 2))

    x = jax.random.normal(next(keys), (B, N, nfeat), jnp.float32)
    adj = (jax.random.uniform(next(keys), (B, N, N)) > 0.4).astype(jnp.float32)
    adj = jnp.maximum(adj, jnp.eye(N, dtype=jnp.float32)[None])  # self loops

    head_params = []
    for _ in range(nheads):
        W = _xavier_uniform(next(keys), (nfeat, nhid))
        a = _xavier_uniform(next(keys), (2 * nhid, 1))
        head_params.append((W, a))
    W_out = _xavier_uniform(next(keys), (nhid * nheads, nout))
    a_out = _xavier_uniform(next(keys), (2 * nout, 1))

    fwd = jax.jit(
        functools.partial(
            gat_forward,
            head_params=head_params,
            out_params=(W_out, a_out),
            alpha=alpha,
        )
    )
    out = jax.block_until_ready(fwd(x, adj))

    assert out.shape == (B, N, nout), out.shape
    assert bool(jnp.all(jnp.isfinite(out)))
    # rows of exp(log_softmax) must sum to 1
    row_sums = jnp.sum(jnp.exp(out), axis=-1)
    assert bool(jnp.all(jnp.abs(row_sums - 1.0) < 1e-3))
    # Compare against a reference that mirrors the kernel's intentional bf16
    # MXU split (f32 accumulation), so the check isolates logic errors; the
    # deviation from a full-f32 reference is dominated by the bf16 precision
    # choice, not kernel structure.
    ref = _gat_reference(x, adj, head_params, (W_out, a_out), alpha, mixed=True)
    assert float(jnp.max(jnp.abs(out - ref))) < 5e-3
    print("KERNEL_OK")
</pallas_src>

<mosaic_0001>
module attributes {stable_mosaic.version = 11 : i64} {
  func.func @kernel(%arg0: i32, %arg1: memref<1x8x16xf32, #tpu.memory_space<vmem>>, %arg2: memref<1x8x8xf32, #tpu.memory_space<vmem>>, %arg3: memref<16x16xbf16, #tpu.memory_space<vmem>>, %arg4: memref<16x2xf32, #tpu.memory_space<vmem>>, %arg5: memref<2x8xf32, #tpu.memory_space<vmem>>, %arg6: memref<16x4xbf16, #tpu.memory_space<vmem>>, %arg7: memref<4x1xf32, #tpu.memory_space<vmem>>, %arg8: memref<1x4xf32, #tpu.memory_space<vmem>>, %arg9: memref<1x8x4xf32, #tpu.memory_space<vmem>>) attributes {dimension_semantics = [#tpu.dimension_semantics<parallel>], iteration_bounds = array<i64: 2>, scalar_prefetch = 0 : i64, scratch_operands = 0 : i64, tpu.core_type = #tpu.core_type<tc>, window_params = [{transform_indices = @transform_0, window_bounds = array<i64: 1, 8, 16>}, {transform_indices = @transform_1, window_bounds = array<i64: 1, 8, 8>}, {pipeline_mode = #tpu.pipeline_mode<synchronous>, transform_indices = @transform_2, window_bounds = array<i64: 16, 16>}, {pipeline_mode = #tpu.pipeline_mode<synchronous>, transform_indices = @transform_3, window_bounds = array<i64: 16, 2>}, {pipeline_mode = #tpu.pipeline_mode<synchronous>, transform_indices = @transform_4, window_bounds = array<i64: 2, 8>}, {pipeline_mode = #tpu.pipeline_mode<synchronous>, transform_indices = @transform_5, window_bounds = array<i64: 16, 4>}, {pipeline_mode = #tpu.pipeline_mode<synchronous>, transform_indices = @transform_6, window_bounds = array<i64: 4, 1>}, {pipeline_mode = #tpu.pipeline_mode<synchronous>, transform_indices = @transform_7, window_bounds = array<i64: 1, 4>}, {transform_indices = @transform_8, window_bounds = array<i64: 1, 8, 4>}]} {
    %c0 = arith.constant 0 : index
    %c0_0 = arith.constant 0 : index
    %c0_1 = arith.constant 0 : index
    %0 = vector.load %arg2[%c0, %c0_0, %c0_1] : memref<1x8x8xf32, #tpu.memory_space<vmem>>, vector<1x8x8xf32>
    %cst = arith.constant 0.000000e+00 : f32
    %1 = vector.broadcast %cst : f32 to vector<1x8x8xf32>
    %2 = arith.cmpf ogt, %0, %1 : vector<1x8x8xf32>
    %c0_2 = arith.constant 0 : index
    %c0_3 = arith.constant 0 : index
    %c0_4 = arith.constant 0 : index
    %3 = vector.load %arg1[%c0_2, %c0_3, %c0_4] : memref<1x8x16xf32, #tpu.memory_space<vmem>>, vector<1x8x16xf32>
    %4 = vector.shape_cast %3 : vector<1x8x16xf32> to vector<8x16xf32>
    %5 = arith.truncf %4 : vector<8x16xf32> to vector<8x16xbf16>
    %c0_5 = arith.constant 0 : index
    %c0_6 = arith.constant 0 : index
    %6 = vector.load %arg3[%c0_5, %c0_6] : memref<16x16xbf16, #tpu.memory_space<vmem>>, vector<16x16xbf16>
    %cst_7 = arith.constant dense<0.000000e+00> : vector<8x16xf32>
    %7 = tpu.matmul %5, %6, %cst_7 {dimension_numbers = #tpu.dot_dimension_numbers<[1], [0], [0], [1], [0, 0, 1, 1], [], []>} : vector<8x16xbf16>, vector<16x16xbf16>, vector<8x16xf32> -> vector<8x16xf32>
    %c0_8 = arith.constant 0 : index
    %c0_9 = arith.constant 0 : index
    %8 = vector.load %arg4[%c0_8, %c0_9] : memref<16x2xf32, #tpu.memory_space<vmem>>, vector<16x2xf32>
    %cst_10 = arith.constant dense<0.000000e+00> : vector<8x2xf32>
    %9 = tpu.matmul %7, %8, %cst_10 {dimension_numbers = #tpu.dot_dimension_numbers<[1], [0], [0], [1], [0, 0, 1, 1], [], []>} : vector<8x16xf32>, vector<16x2xf32>, vector<8x2xf32> -> vector<8x2xf32>
    %10 = vector.shape_cast %9 : vector<8x2xf32> to vector<1x8x2xf32>
    %c0_11 = arith.constant 0 : index
    %c0_12 = arith.constant 0 : index
    %11 = vector.load %arg5[%c0_11, %c0_12] : memref<2x8xf32, #tpu.memory_space<vmem>>, vector<2x8xf32>
    %c0_13 = arith.constant 0 : index
    %c0_14 = arith.constant 0 : index
    %12 = vector.load %arg6[%c0_13, %c0_14] : memref<16x4xbf16, #tpu.memory_space<vmem>>, vector<16x4xbf16>
    %cst_15 = arith.constant 0.000000e+00 : f32
    %13 = vector.broadcast %cst_15 : f32 to vector<8x4xf32>
    %14 = vector.extract_strided_slice %7 {offsets = [0, 0], sizes = [8, 8], strides = [1, 1]} : vector<8x16xf32> to vector<8x8xf32>
    %15 = vector.shape_cast %14 : vector<8x8xf32> to vector<1x8x8xf32>
    %16 = vector.extract_strided_slice %10 {offsets = [0, 0, 0], sizes = [1, 8, 1], strides = [1, 1, 1]} : vector<1x8x2xf32> to vector<1x8x1xf32>
    %17 = vector.extract_strided_slice %11 {offsets = [0, 0], sizes = [1, 8], strides = [1, 1]} : vector<2x8xf32> to vector<1x8xf32>
    %18 = vector.shape_cast %17 : vector<1x8xf32> to vector<8xf32>
    %19 = vector.shape_cast %18 : vector<8xf32> to vector<1x1x8xf32>
    "tpu.trace_start"() <{level = 10 : i32, message = "bof,bnf->bon"}> : () -> ()
    %cst_16 = arith.constant dense<0.000000e+00> : vector<1x1x8xf32>
    %20 = tpu.matmul %19, %15, %cst_16 {dimension_numbers = #tpu.dot_dimension_numbers<[2], [2], [1], [1], [0, 0, 0, 1, 1, 1], [0], [0]>} : vector<1x1x8xf32>, vector<1x8x8xf32>, vector<1x1x8xf32> -> vector<1x1x8xf32>
    "tpu.trace_stop"() : () -> ()
    %21 = vector.broadcast %16 : vector<1x8x1xf32> to vector<1x8x8xf32>
    %22 = vector.broadcast %20 : vector<1x1x8xf32> to vector<1x8x8xf32>
    %23 = arith.addf %21, %22 : vector<1x8x8xf32>
    %cst_17 = arith.constant 0.000000e+00 : f32
    %24 = vector.broadcast %cst_17 : f32 to vector<1x8x8xf32>
    %25 = arith.cmpf ogt, %23, %24 : vector<1x8x8xf32>
    %cst_18 = arith.constant 2.000000e-01 : f32
    %26 = vector.broadcast %cst_18 : f32 to vector<1x8x8xf32>
    %27 = arith.mulf %26, %23 : vector<1x8x8xf32>
    %28 = arith.select %25, %23, %27 : vector<1x8x8xi1>, vector<1x8x8xf32>
    %cst_19 = arith.constant -9.000000e+15 : f32
    %29 = vector.broadcast %cst_19 : f32 to vector<1x8x8xf32>
    %30 = arith.select %2, %28, %29 : vector<1x8x8xi1>, vector<1x8x8xf32>
    %cst_20 = arith.constant dense<0xFF800000> : vector<1x8xf32>
    %31 = vector.multi_reduction <maximumf>, %30, %cst_20 [2] : vector<1x8x8xf32> to vector<1x8xf32>
    %32 = vector.shape_cast %31 : vector<1x8xf32> to vector<1x8x1xf32>
    %33 = vector.broadcast %32 : vector<1x8x1xf32> to vector<1x8x8xf32>
    %34 = arith.subf %30, %33 : vector<1x8x8xf32>
    %35 = math.exp %34 : vector<1x8x8xf32>
    %cst_21 = arith.constant 1.000000e+00 : bf16
    %36 = vector.broadcast %cst_21 : bf16 to vector<1x8x1xbf16>
    %37 = arith.truncf %15 : vector<1x8x8xf32> to vector<1x8x8xbf16>
    %38 = tpu.concatenate %37, %36 in 2 : vector<1x8x8xbf16>, vector<1x8x1xbf16> -> vector<1x8x9xbf16>
    %39 = arith.truncf %35 : vector<1x8x8xf32> to vector<1x8x8xbf16>
    "tpu.trace_start"() <{level = 10 : i32, message = "bqk,bkf->bqf"}> : () -> ()
    %cst_22 = arith.constant dense<0.000000e+00> : vector<1x8x9xf32>
    %40 = tpu.matmul %39, %38, %cst_22 {dimension_numbers = #tpu.dot_dimension_numbers<[2], [1], [1], [2], [0, 0, 0, 1, 1, 2], [0], [0]>} : vector<1x8x8xbf16>, vector<1x8x9xbf16>, vector<1x8x9xf32> -> vector<1x8x9xf32>
    "tpu.trace_stop"() : () -> ()
    %41 = vector.extract_strided_slice %40 {offsets = [0, 0, 8], sizes = [1, 8, 1], strides = [1, 1, 1]} : vector<1x8x9xf32> to vector<1x8x1xf32>
    %42 = tpu.reciprocal %41 : vector<1x8x1xf32> -> vector<1x8x1xf32>
    %43 = vector.extract_strided_slice %40 {offsets = [0, 0, 0], sizes = [1, 8, 8], strides = [1, 1, 1]} : vector<1x8x9xf32> to vector<1x8x8xf32>
    %44 = vector.broadcast %42 : vector<1x8x1xf32> to vector<1x8x8xf32>
    %45 = arith.mulf %43, %44 : vector<1x8x8xf32>
    %cst_23 = arith.constant 0.000000e+00 : f32
    %46 = vector.broadcast %cst_23 : f32 to vector<1x8x8xf32>
    %47 = arith.cmpf ogt, %45, %46 : vector<1x8x8xf32>
    %cst_24 = arith.constant 0.000000e+00 : f32
    %48 = vector.broadcast %cst_24 : f32 to vector<1x8x8xf32>
    %49 = arith.minimumf %45, %48 : vector<1x8x8xf32>
    %50 = math.exp %49 : vector<1x8x8xf32>
    %cst_25 = arith.constant 1.000000e+00 : f32
    %51 = vector.broadcast %cst_25 : f32 to vector<1x8x8xf32>
    %52 = arith.subf %50, %51 : vector<1x8x8xf32>
    %53 = arith.select %47, %45, %52 : vector<1x8x8xi1>, vector<1x8x8xf32>
    %54 = vector.shape_cast %53 : vector<1x8x8xf32> to vector<8x8xf32>
    %55 = arith.truncf %54 : vector<8x8xf32> to vector<8x8xbf16>
    %56 = vector.extract_strided_slice %12 {offsets = [0, 0], sizes = [8, 4], strides = [1, 1]} : vector<16x4xbf16> to vector<8x4xbf16>
    %cst_26 = arith.constant dense<0.000000e+00> : vector<8x4xf32>
    %57 = tpu.matmul %55, %56, %cst_26 {dimension_numbers = #tpu.dot_dimension_numbers<[1], [0], [0], [1], [0, 0, 1, 1], [], []>} : vector<8x8xbf16>, vector<8x4xbf16>, vector<8x4xf32> -> vector<8x4xf32>
    %58 = arith.addf %13, %57 : vector<8x4xf32>
    %59 = vector.extract_strided_slice %7 {offsets = [0, 8], sizes = [8, 8], strides = [1, 1]} : vector<8x16xf32> to vector<8x8xf32>
    %60 = vector.shape_cast %59 : vector<8x8xf32> to vector<1x8x8xf32>
    %61 = vector.extract_strided_slice %10 {offsets = [0, 0, 1], sizes = [1, 8, 1], strides = [1, 1, 1]} : vector<1x8x2xf32> to vector<1x8x1xf32>
    %62 = vector.extract_strided_slice %11 {offsets = [1, 0], sizes = [1, 8], strides = [1, 1]} : vector<2x8xf32> to vector<1x8xf32>
    %63 = vector.shape_cast %62 : vector<1x8xf32> to vector<8xf32>
    %64 = vector.shape_cast %63 : vector<8xf32> to vector<1x1x8xf32>
    "tpu.trace_start"() <{level = 10 : i32, message = "bof,bnf->bon"}> : () -> ()
    %cst_27 = arith.constant dense<0.000000e+00> : vector<1x1x8xf32>
    %65 = tpu.matmul %64, %60, %cst_27 {dimension_numbers = #tpu.dot_dimension_numbers<[2], [2], [1], [1], [0, 0, 0, 1, 1, 1], [0], [0]>} : vector<1x1x8xf32>, vector<1x8x8xf32>, vector<1x1x8xf32> -> vector<1x1x8xf32>
    "tpu.trace_stop"() : () -> ()
    %66 = vector.broadcast %61 : vector<1x8x1xf32> to vector<1x8x8xf32>
    %67 = vector.broadcast %65 : vector<1x1x8xf32> to vector<1x8x8xf32>
    %68 = arith.addf %66, %67 : vector<1x8x8xf32>
    %cst_28 = arith.constant 0.000000e+00 : f32
    %69 = vector.broadcast %cst_28 : f32 to vector<1x8x8xf32>
    %70 = arith.cmpf ogt, %68, %69 : vector<1x8x8xf32>
    %cst_29 = arith.constant 2.000000e-01 : f32
    %71 = vector.broadcast %cst_29 : f32 to vector<1x8x8xf32>
    %72 = arith.mulf %71, %68 : vector<1x8x8xf32>
    %73 = arith.select %70, %68, %72 : vector<1x8x8xi1>, vector<1x8x8xf32>
    %cst_30 = arith.constant -9.000000e+15 : f32
    %74 = vector.broadcast %cst_30 : f32 to vector<1x8x8xf32>
    %75 = arith.select %2, %73, %74 : vector<1x8x8xi1>, vector<1x8x8xf32>
    %cst_31 = arith.constant dense<0xFF800000> : vector<1x8xf32>
    %76 = vector.multi_reduction <maximumf>, %75, %cst_31 [2] : vector<1x8x8xf32> to vector<1x8xf32>
    %77 = vector.shape_cast %76 : vector<1x8xf32> to vector<1x8x1xf32>
    %78 = vector.broadcast %77 : vector<1x8x1xf32> to vector<1x8x8xf32>
    %79 = arith.subf %75, %78 : vector<1x8x8xf32>
    %80 = math.exp %79 : vector<1x8x8xf32>
    %cst_32 = arith.constant 1.000000e+00 : bf16
    %81 = vector.broadcast %cst_32 : bf16 to vector<1x8x1xbf16>
    %82 = arith.truncf %60 : vector<1x8x8xf32> to vector<1x8x8xbf16>
    %83 = tpu.concatenate %82, %81 in 2 : vector<1x8x8xbf16>, vector<1x8x1xbf16> -> vector<1x8x9xbf16>
    %84 = arith.truncf %80 : vector<1x8x8xf32> to vector<1x8x8xbf16>
    "tpu.trace_start"() <{level = 10 : i32, message = "bqk,bkf->bqf"}> : () -> ()
    %cst_33 = arith.constant dense<0.000000e+00> : vector<1x8x9xf32>
    %85 = tpu.matmul %84, %83, %cst_33 {dimension_numbers = #tpu.dot_dimension_numbers<[2], [1], [1], [2], [0, 0, 0, 1, 1, 2], [0], [0]>} : vector<1x8x8xbf16>, vector<1x8x9xbf16>, vector<1x8x9xf32> -> vector<1x8x9xf32>
    "tpu.trace_stop"() : () -> ()
    %86 = vector.extract_strided_slice %85 {offsets = [0, 0, 8], sizes = [1, 8, 1], strides = [1, 1, 1]} : vector<1x8x9xf32> to vector<1x8x1xf32>
    %87 = tpu.reciprocal %86 : vector<1x8x1xf32> -> vector<1x8x1xf32>
    %88 = vector.extract_strided_slice %85 {offsets = [0, 0, 0], sizes = [1, 8, 8], strides = [1, 1, 1]} : vector<1x8x9xf32> to vector<1x8x8xf32>
    %89 = vector.broadcast %87 : vector<1x8x1xf32> to vector<1x8x8xf32>
    %90 = arith.mulf %88, %89 : vector<1x8x8xf32>
    %cst_34 = arith.constant 0.000000e+00 : f32
    %91 = vector.broadcast %cst_34 : f32 to vector<1x8x8xf32>
    %92 = arith.cmpf ogt, %90, %91 : vector<1x8x8xf32>
    %cst_35 = arith.constant 0.000000e+00 : f32
    %93 = vector.broadcast %cst_35 : f32 to vector<1x8x8xf32>
    %94 = arith.minimumf %90, %93 : vector<1x8x8xf32>
    %95 = math.exp %94 : vector<1x8x8xf32>
    %cst_36 = arith.constant 1.000000e+00 : f32
    %96 = vector.broadcast %cst_36 : f32 to vector<1x8x8xf32>
    %97 = arith.subf %95, %96 : vector<1x8x8xf32>
    %98 = arith.select %92, %90, %97 : vector<1x8x8xi1>, vector<1x8x8xf32>
    %99 = vector.shape_cast %98 : vector<1x8x8xf32> to vector<8x8xf32>
    %100 = arith.truncf %99 : vector<8x8xf32> to vector<8x8xbf16>
    %101 = vector.extract_strided_slice %12 {offsets = [8, 0], sizes = [8, 4], strides = [1, 1]} : vector<16x4xbf16> to vector<8x4xbf16>
    %cst_37 = arith.constant dense<0.000000e+00> : vector<8x4xf32>
    %102 = tpu.matmul %100, %101, %cst_37 {dimension_numbers = #tpu.dot_dimension_numbers<[1], [0], [0], [1], [0, 0, 1, 1], [], []>} : vector<8x8xbf16>, vector<8x4xbf16>, vector<8x4xf32> -> vector<8x4xf32>
    %103 = arith.addf %58, %102 : vector<8x4xf32>
    %c0_38 = arith.constant 0 : index
    %c0_39 = arith.constant 0 : index
    %104 = vector.load %arg7[%c0_38, %c0_39] : memref<4x1xf32, #tpu.memory_space<vmem>>, vector<4x1xf32>
    %cst_40 = arith.constant dense<0.000000e+00> : vector<8x1xf32>
    %105 = tpu.matmul %103, %104, %cst_40 {dimension_numbers = #tpu.dot_dimension_numbers<[1], [0], [0], [1], [0, 0, 1, 1], [], []>} : vector<8x4xf32>, vector<4x1xf32>, vector<8x1xf32> -> vector<8x1xf32>
    %106 = vector.shape_cast %105 : vector<8x1xf32> to vector<1x8x1xf32>
    %107 = vector.shape_cast %103 : vector<8x4xf32> to vector<1x8x4xf32>
    %c0_41 = arith.constant 0 : index
    %c0_42 = arith.constant 0 : index
    %108 = vector.load %arg8[%c0_41, %c0_42] : memref<1x4xf32, #tpu.memory_space<vmem>>, vector<1x4xf32>
    %109 = vector.shape_cast %108 : vector<1x4xf32> to vector<1x1x4xf32>
    "tpu.trace_start"() <{level = 10 : i32, message = "bof,bnf->bon"}> : () -> ()
    %cst_43 = arith.constant dense<0.000000e+00> : vector<1x1x8xf32>
    %110 = tpu.matmul %109, %107, %cst_43 {dimension_numbers = #tpu.dot_dimension_numbers<[2], [2], [1], [1], [0, 0, 0, 1, 1, 1], [0], [0]>} : vector<1x1x4xf32>, vector<1x8x4xf32>, vector<1x1x8xf32> -> vector<1x1x8xf32>
    "tpu.trace_stop"() : () -> ()
    %111 = vector.broadcast %106 : vector<1x8x1xf32> to vector<1x8x8xf32>
    %112 = vector.broadcast %110 : vector<1x1x8xf32> to vector<1x8x8xf32>
    %113 = arith.addf %111, %112 : vector<1x8x8xf32>
    %cst_44 = arith.constant 0.000000e+00 : f32
    %114 = vector.broadcast %cst_44 : f32 to vector<1x8x8xf32>
    %115 = arith.cmpf ogt, %113, %114 : vector<1x8x8xf32>
    %cst_45 = arith.constant 2.000000e-01 : f32
    %116 = vector.broadcast %cst_45 : f32 to vector<1x8x8xf32>
    %117 = arith.mulf %116, %113 : vector<1x8x8xf32>
    %118 = arith.select %115, %113, %117 : vector<1x8x8xi1>, vector<1x8x8xf32>
    %cst_46 = arith.constant -9.000000e+15 : f32
    %119 = vector.broadcast %cst_46 : f32 to vector<1x8x8xf32>
    %120 = arith.select %2, %118, %119 : vector<1x8x8xi1>, vector<1x8x8xf32>
    %cst_47 = arith.constant dense<0xFF800000> : vector<1x8xf32>
    %121 = vector.multi_reduction <maximumf>, %120, %cst_47 [2] : vector<1x8x8xf32> to vector<1x8xf32>
    %122 = vector.shape_cast %121 : vector<1x8xf32> to vector<1x8x1xf32>
    %123 = vector.broadcast %122 : vector<1x8x1xf32> to vector<1x8x8xf32>
    %124 = arith.subf %120, %123 : vector<1x8x8xf32>
    %125 = math.exp %124 : vector<1x8x8xf32>
    %cst_48 = arith.constant 1.000000e+00 : bf16
    %126 = vector.broadcast %cst_48 : bf16 to vector<1x8x1xbf16>
    %127 = arith.truncf %107 : vector<1x8x4xf32> to vector<1x8x4xbf16>
    %128 = tpu.concatenate %127, %126 in 2 : vector<1x8x4xbf16>, vector<1x8x1xbf16> -> vector<1x8x5xbf16>
    %129 = arith.truncf %125 : vector<1x8x8xf32> to vector<1x8x8xbf16>
    "tpu.trace_start"() <{level = 10 : i32, message = "bqk,bkf->bqf"}> : () -> ()
    %cst_49 = arith.constant dense<0.000000e+00> : vector<1x8x5xf32>
    %130 = tpu.matmul %129, %128, %cst_49 {dimension_numbers = #tpu.dot_dimension_numbers<[2], [1], [1], [2], [0, 0, 0, 1, 1, 2], [0], [0]>} : vector<1x8x8xbf16>, vector<1x8x5xbf16>, vector<1x8x5xf32> -> vector<1x8x5xf32>
    "tpu.trace_stop"() : () -> ()
    %131 = vector.extract_strided_slice %130 {offsets = [0, 0, 4], sizes = [1, 8, 1], strides = [1, 1, 1]} : vector<1x8x5xf32> to vector<1x8x1xf32>
    %132 = tpu.reciprocal %131 : vector<1x8x1xf32> -> vector<1x8x1xf32>
    %133 = vector.extract_strided_slice %130 {offsets = [0, 0, 0], sizes = [1, 8, 4], strides = [1, 1, 1]} : vector<1x8x5xf32> to vector<1x8x4xf32>
    %134 = vector.broadcast %132 : vector<1x8x1xf32> to vector<1x8x4xf32>
    %135 = arith.mulf %133, %134 : vector<1x8x4xf32>
    %cst_50 = arith.constant 0.000000e+00 : f32
    %136 = vector.broadcast %cst_50 : f32 to vector<1x8x4xf32>
    %137 = arith.cmpf ogt, %135, %136 : vector<1x8x4xf32>
    %cst_51 = arith.constant 0.000000e+00 : f32
    %138 = vector.broadcast %cst_51 : f32 to vector<1x8x4xf32>
    %139 = arith.minimumf %135, %138 : vector<1x8x4xf32>
    %140 = math.exp %139 : vector<1x8x4xf32>
    %cst_52 = arith.constant 1.000000e+00 : f32
    %141 = vector.broadcast %cst_52 : f32 to vector<1x8x4xf32>
    %142 = arith.subf %140, %141 : vector<1x8x4xf32>
    %143 = arith.select %137, %135, %142 : vector<1x8x4xi1>, vector<1x8x4xf32>
    %cst_53 = arith.constant dense<0xFF800000> : vector<1x8xf32>
    %144 = vector.multi_reduction <maximumf>, %143, %cst_53 [2] : vector<1x8x4xf32> to vector<1x8xf32>
    %145 = vector.shape_cast %144 : vector<1x8xf32> to vector<1x8x1xf32>
    %146 = vector.broadcast %145 : vector<1x8x1xf32> to vector<1x8x4xf32>
    %147 = arith.subf %143, %146 : vector<1x8x4xf32>
    %148 = math.exp %147 : vector<1x8x4xf32>
    %cst_54 = arith.constant dense<0.000000e+00> : vector<1x8xf32>
    %149 = vector.multi_reduction <add>, %148, %cst_54 [2] : vector<1x8x4xf32> to vector<1x8xf32>
    %150 = vector.shape_cast %149 : vector<1x8xf32> to vector<1x8x1xf32>
    %151 = math.log %150 : vector<1x8x1xf32>
    %152 = arith.addf %151, %145 : vector<1x8x1xf32>
    %153 = vector.broadcast %152 : vector<1x8x1xf32> to vector<1x8x4xf32>
    %154 = arith.subf %143, %153 : vector<1x8x4xf32>
    %c0_55 = arith.constant 0 : index
    %c0_56 = arith.constant 0 : index
    %c0_57 = arith.constant 0 : index
    %155 = vector.load %arg9[%c0_55, %c0_56, %c0_57] : memref<1x8x4xf32, #tpu.memory_space<vmem>>, vector<1x8x4xf32>
    tpu.vector_store %arg9[%c0_55, %c0_56, %c0_57], %154 {strides = array<i32>} : memref<1x8x4xf32, #tpu.memory_space<vmem>>, vector<1x8x4xf32>,
    return
  }
  func.func @transform_0(%arg0: i32) -> (i32, i32, i32) {
    %c0_i32 = arith.constant 0 : i32
    %c0_i32_0 = arith.constant 0 : i32
    %c0_i32_1 = arith.constant 0 : i32
    return %arg0, %c0_i32, %c0_i32_0 : i32, i32, i32
  }
  func.func @transform_1(%arg0: i32) -> (i32, i32, i32) {
    %c0_i32 = arith.constant 0 : i32
    %c0_i32_0 = arith.constant 0 : i32
    %c0_i32_1 = arith.constant 0 : i32
    return %arg0, %c0_i32, %c0_i32_0 : i32, i32, i32
  }
  func.func @transform_2(%arg0: i32) -> (i32, i32) {
    %c0_i32 = arith.constant 0 : i32
    %c0_i32_0 = arith.constant 0 : i32
    %c0_i32_1 = arith.constant 0 : i32
    return %c0_i32, %c0_i32_0 : i32, i32
  }
  func.func @transform_3(%arg0: i32) -> (i32, i32) {
    %c0_i32 = arith.constant 0 : i32
    %c0_i32_0 = arith.constant 0 : i32
    %c0_i32_1 = arith.constant 0 : i32
    return %c0_i32, %c0_i32_0 : i32, i32
  }
  func.func @transform_4(%arg0: i32) -> (i32, i32) {
    %c0_i32 = arith.constant 0 : i32
    %c0_i32_0 = arith.constant 0 : i32
    %c0_i32_1 = arith.constant 0 : i32
    return %c0_i32, %c0_i32_0 : i32, i32
  }
  func.func @transform_5(%arg0: i32) -> (i32, i32) {
    %c0_i32 = arith.constant 0 : i32
    %c0_i32_0 = arith.constant 0 : i32
    %c0_i32_1 = arith.constant 0 : i32
    return %c0_i32, %c0_i32_0 : i32, i32
  }
  func.func @transform_6(%arg0: i32) -> (i32, i32) {
    %c0_i32 = arith.constant 0 : i32
    %c0_i32_0 = arith.constant 0 : i32
    %c0_i32_1 = arith.constant 0 : i32
    return %c0_i32, %c0_i32_0 : i32, i32
  }
  func.func @transform_7(%arg0: i32) -> (i32, i32) {
    %c0_i32 = arith.constant 0 : i32
    %c0_i32_0 = arith.constant 0 : i32
    %c0_i32_1 = arith.constant 0 : i32
    return %c0_i32, %c0_i32_0 : i32, i32
  }
  func.func @transform_8(%arg0: i32) -> (i32, i32, i32) {
    %c0_i32 = arith.constant 0 : i32
    %c0_i32_0 = arith.constant 0 : i32
    %c0_i32_1 = arith.constant 0 : i32
    return %arg0, %c0_i32, %c0_i32_0 : i32, i32, i32
  }
}

</mosaic_0001>

<llo_original>
// kernel: gat_forward.1
$region0: #{gat_forward.1}
  #allocation0 [shape = 'u32[]', space=smem, size = 0x4, offset = 0x4, fixed_abs, tag = 'smem constant byte address 0x4 - core index']
  #allocation1 [shape = 'u32[144,128]{1,0:T(1,128)}', space=vmem, size = 0x12000, scoped, tag = 'internal scratch']
  %s0 = inlined_call_operand.hbm [shape: f32[2,8,16], index: 0, kind: input, shape index: {}]
  %s1 = inlined_call_operand.hbm [shape: f32[2,8,8], index: 1, kind: input, shape index: {}]
  %s2 = inlined_call_operand.vmem [shape: bf16[16,16], index: 2, kind: input, shape index: {}]
  %s3 = inlined_call_operand.hbm [shape: f32[16,2], index: 3, kind: input, shape index: {}]
  %s4 = inlined_call_operand.vmem [shape: f32[2,8], index: 4, kind: input, shape index: {}]
  %s5 = inlined_call_operand.hbm [shape: bf16[16,4], index: 5, kind: input, shape index: {}]
  %s6 = inlined_call_operand.hbm [shape: f32[4,1], index: 6, kind: input, shape index: {}]
  %s7 = inlined_call_operand.hbm [shape: f32[1,4], index: 7, kind: input, shape index: {}]
  %s8 = inlined_call_operand.vmem [shape: f32[2,8,4], index: 8, kind: output, shape index: {}]
  %s9 = sld [smem:[#allocation0]]
  $region89: #{gat_forward.1} parent=0
    _
  %s11 = ssub.s32 1, %s9
  %s12 = scalar_select 0, %s11, %s9
  $region1: #{gat_forward.1} parent=0
    #allocation2 [shape = 'u8[8192]{0}', space=vmem, size = 0x2000, scoped, tag = 'input window, operand 0']
    #allocation3 [shape = 's32[2]{0}', space=sflag, size = 0x8, scoped, tag = 'scoped memory for gat_forward.1']
    #allocation4 [shape = 'u8[8192]{0}', space=vmem, size = 0x2000, scoped, tag = 'input window, operand 1']
    #allocation5 [shape = 's32[2]{0}', space=sflag, size = 0x8, scoped, tag = 'scoped memory for gat_forward.1']
    #allocation6 [shape = 'u8[8192]{0}', space=vmem, size = 0x2000, scoped, tag = 'input window, operand 3, single buffered']
    #allocation7 [shape = 'u8[4096]{0}', space=vmem, size = 0x1000, scoped, tag = 'input window, operand 5, single buffered']
    #allocation8 [shape = 's32[1]{0}', space=sflag, size = 0x4, scoped, tag = 'scoped memory for gat_forward.1']
    #allocation9 [shape = 'u8[2048]{0}', space=vmem, size = 0x800, scoped, tag = 'input window, operand 6, single buffered']
    #allocation10 [shape = 'u8[512]{0}', space=vmem, size = 0x400, scoped, tag = 'input window, operand 7, single buffered']
    #allocation11 [shape = 's32[1]{0}', space=sflag, size = 0x4, scoped, tag = 'scoped memory for gat_forward.1']
    %13 = vsyncpa [#allocation3], 0
    %s14 = scalar_lea.sflag [#allocation3], 1
    %15 = vsyncpa %s14, 0
    %16 = vsyncpa [#allocation5], 0
    %s17 = scalar_lea.sflag [#allocation5], 1
    %18 = vsyncpa %s17, 0
    %19 = vsyncpa [#allocation8], 0
    %20 = vsyncpa [#allocation11], 0
    loop: start=0, step=1, limit=4
    $region2: #{gat_forward.1} parent=1 // loop_pre_header
      _
    $region3: #{gat_forward.1} parent=1 // loop_header
      %s22 = sphi 0, %s26
      %p23 = scmp.ge.s32.totalorder %s22, 4
      %s32 = sphi 0, %s34
      %s35 = sphi 0, %s32
      %s36 = sphi 0, %s35
      %s52 = sphi 0, %s36
      %s58 = sphi 0, %s60
      %s61 = sphi 0, %s58
      %s62 = sphi 0, %s61
      %s78 = sphi 0, %s62
      %s82 = sphi 0, %s82
      %s84 = sphi 0, %s82
      %s85 = sphi 0, %s84
      %s99 = sphi 0, %s85
      %s103 = sphi 0, %s103
      %s105 = sphi 0, %s103
      %s106 = sphi 0, %s105
      %s120 = sphi 0, %s106
      %s124 = sphi 0, %s124
      %s126 = sphi 0, %s124
      %s127 = sphi 0, %s126
      %s141 = sphi 0, %s127
      %s145 = sphi 0, %s145
      %s147 = sphi 0, %s145
      %s148 = sphi 0, %s147
      %s162 = sphi 0, %s148
      %s166 = sphi 0, %s166
      %s168 = sphi 0, %s166
      %s169 = sphi 0, %s168
      %s183 = sphi 0, %s169
      %s187 = sphi 0, %s187
      %s189 = sphi 0, %s187
      %s190 = sphi 0, %s189
      %s204 = sphi 0, %s190
      %s210 = sphi 0, %s212
      %s213 = sphi 0, %s210
      %s214 = sphi 0, %s213
      %s230 = sphi 0, %s214
    $region4: #{gat_forward.1} parent=1 // loop_header_branch
      %25 = sbr.rel (%p23) target = $region8
    $region5: #{gat_forward.1} parent=1 // loop_body
      %s27 = ssub.s32 %s22, 1
      %s28 = ssub.s32 %s22, 2
      %s29 = sadd.s32 %s22, 1
      %s30 = ssub.s32 %s22, %s29
      %p31 = scmp.eq.s32.totalorder %s30, 0
      %s33 = sadd.s32 %s32, 1
      %s34 = scalar_select %p31, %s32, %s33
      %p37 = pneg %p31
      %p38 = scmp.eq.s32.totalorder %s22, 1
      %p39 = por %p37, %p38
      %p40 = scmp.ne.s32.totalorder %s32, %s35
      %p41 = scmp.eq.s32.totalorder %s22, 0
      %p42 = por %p40, %p41
      %p43 = scmp.ne.s32.totalorder %s32, %s35
      %p44 = scmp.eq.s32.totalorder %s27, 1
      %p45 = por %p43, %p44
      %p46 = scmp.ne.s32.totalorder %s35, %s36
      %p47 = scmp.eq.s32.totalorder %s27, 0
      %p48 = por %p46, %p47
      %p49 = scmp.ne.s32.totalorder %s35, %s36
      %p50 = scmp.eq.s32.totalorder %s28, 1
      %p51 = por %p49, %p50
      %p53 = scmp.ne.s32.totalorder %s36, %s52
      %p54 = scmp.eq.s32.totalorder %s28, 0
      %p55 = por %p53, %p54
      %s56 = ssub.s32 %s22, %s29
      %p57 = scmp.eq.s32.totalorder %s56, 0
      %s59 = sadd.s32 %s58, 1
      %s60 = scalar_select %p57, %s58, %s59
      %p63 = pneg %p57
      %p64 = scmp.eq.s32.totalorder %s22, 1
      %p65 = por %p63, %p64
      %p66 = scmp.ne.s32.totalorder %s58, %s61
      %p67 = scmp.eq.s32.totalorder %s22, 0
      %p68 = por %p66, %p67
      %p69 = scmp.ne.s32.totalorder %s58, %s61
      %p70 = scmp.eq.s32.totalorder %s27, 1
      %p71 = por %p69, %p70
      %p72 = scmp.ne.s32.totalorder %s61, %s62
      %p73 = scmp.eq.s32.totalorder %s27, 0
      %p74 = por %p72, %p73
      %p75 = scmp.ne.s32.totalorder %s61, %s62
      %p76 = scmp.eq.s32.totalorder %s28, 1
      %p77 = por %p75, %p76
      %p79 = scmp.ne.s32.totalorder %s62, %s78
      %p80 = scmp.eq.s32.totalorder %s28, 0
      %p81 = por %p79, %p80
      %s83 = sadd.s32 %s82, 1
      %p86 = scmp.eq.s32.totalorder %s22, 1
      %p87 = scmp.ne.s32.totalorder %s82, %s84
      %p88 = scmp.eq.s32.totalorder %s22, 0
      %p89 = por %p87, %p88
      %p90 = scmp.ne.s32.totalorder %s82, %s84
      %p91 = scmp.eq.s32.totalorder %s27, 1
      %p92 = por %p90, %p91
      %p93 = scmp.ne.s32.totalorder %s84, %s85
      %p94 = scmp.eq.s32.totalorder %s27, 0
      %p95 = por %p93, %p94
      %p96 = scmp.ne.s32.totalorder %s84, %s85
      %p97 = scmp.eq.s32.totalorder %s28, 1
      %p98 = por %p96, %p97
      %p100 = scmp.ne.s32.totalorder %s85, %s99
      %p101 = scmp.eq.s32.totalorder %s28, 0
      %p102 = por %p100, %p101
      %s104 = sadd.s32 %s103, 1
      %p107 = scmp.eq.s32.totalorder %s22, 1
      %p108 = scmp.ne.s32.totalorder %s103, %s105
      %p109 = scmp.eq.s32.totalorder %s22, 0
      %p110 = por %p108, %p109
      %p111 = scmp.ne.s32.totalorder %s103, %s105
      %p112 = scmp.eq.s32.totalorder %s27, 1
      %p113 = por %p111, %p112
      %p114 = scmp.ne.s32.totalorder %s105, %s106
      %p115 = scmp.eq.s32.totalorder %s27, 0
      %p116 = por %p114, %p115
      %p117 = scmp.ne.s32.totalorder %s105, %s106
      %p118 = scmp.eq.s32.totalorder %s28, 1
      %p119 = por %p117, %p118
      %p121 = scmp.ne.s32.totalorder %s106, %s120
      %p122 = scmp.eq.s32.totalorder %s28, 0
      %p123 = por %p121, %p122
      %s125 = sadd.s32 %s124, 1
      %p128 = scmp.eq.s32.totalorder %s22, 1
      %p129 = scmp.ne.s32.totalorder %s124, %s126
      %p130 = scmp.eq.s32.totalorder %s22, 0
      %p131 = por %p129, %p130
      %p132 = scmp.ne.s32.totalorder %s124, %s126
      %p133 = scmp.eq.s32.totalorder %s27, 1
      %p134 = por %p132, %p133
      %p135 = scmp.ne.s32.totalorder %s126, %s127
      %p136 = scmp.eq.s32.totalorder %s27, 0
      %p137 = por %p135, %p136
      %p138 = scmp.ne.s32.totalorder %s126, %s127
      %p139 = scmp.eq.s32.totalorder %s28, 1
      %p140 = por %p138, %p139
      %p142 = scmp.ne.s32.totalorder %s127, %s141
      %p143 = scmp.eq.s32.totalorder %s28, 0
      %p144 = por %p142, %p143
      %s146 = sadd.s32 %s145, 1
      %p149 = scmp.eq.s32.totalorder %s22, 1
      %p150 = scmp.ne.s32.totalorder %s145, %s147
      %p151 = scmp.eq.s32.totalorder %s22, 0
      %p152 = por %p150, %p151
      %p153 = scmp.ne.s32.totalorder %s145, %s147
      %p154 = scmp.eq.s32.totalorder %s27, 1
      %p155 = por %p153, %p154
      %p156 = scmp.ne.s32.totalorder %s147, %s148
      %p157 = scmp.eq.s32.totalorder %s27, 0
      %p158 = por %p156, %p157
      %p159 = scmp.ne.s32.totalorder %s147, %s148
      %p160 = scmp.eq.s32.totalorder %s28, 1
      %p161 = por %p159, %p160
      %p163 = scmp.ne.s32.totalorder %s148, %s162
      %p164 = scmp.eq.s32.totalorder %s28, 0
      %p165 = por %p163, %p164
      %s167 = sadd.s32 %s166, 1
      %p170 = scmp.eq.s32.totalorder %s22, 1
      %p171 = scmp.ne.s32.totalorder %s166, %s168
      %p172 = scmp.eq.s32.totalorder %s22, 0
      %p173 = por %p171, %p172
      %p174 = scmp.ne.s32.totalorder %s166, %s168
      %p175 = scmp.eq.s32.totalorder %s27, 1
      %p176 = por %p174, %p175
      %p177 = scmp.ne.s32.totalorder %s168, %s169
      %p178 = scmp.eq.s32.totalorder %s27, 0
      %p179 = por %p177, %p178
      %p180 = scmp.ne.s32.totalorder %s168, %s169
      %p181 = scmp.eq.s32.totalorder %s28, 1
      %p182 = por %p180, %p181
      %p184 = scmp.ne.s32.totalorder %s169, %s183
      %p185 = scmp.eq.s32.totalorder %s28, 0
      %p186 = por %p184, %p185
      %s188 = sadd.s32 %s187, 1
      %p191 = scmp.eq.s32.totalorder %s22, 1
      %p192 = scmp.ne.s32.totalorder %s187, %s189
      %p193 = scmp.eq.s32.totalorder %s22, 0
      %p194 = por %p192, %p193
      %p195 = scmp.ne.s32.totalorder %s187, %s189
      %p196 = scmp.eq.s32.totalorder %s27, 1
      %p197 = por %p195, %p196
      %p198 = scmp.ne.s32.totalorder %s189, %s190
      %p199 = scmp.eq.s32.totalorder %s27, 0
      %p200 = por %p198, %p199
      %p201 = scmp.ne.s32.totalorder %s189, %s190
      %p202 = scmp.eq.s32.totalorder %s28, 1
      %p203 = por %p201, %p202
      %p205 = scmp.ne.s32.totalorder %s190, %s204
      %p206 = scmp.eq.s32.totalorder %s28, 0
      %p207 = por %p205, %p206
      %s208 = ssub.s32 %s22, %s29
      %p209 = scmp.eq.s32.totalorder %s208, 0
      %s211 = sadd.s32 %s210, 1
      %s212 = scalar_select %p209, %s210, %s211
      %p215 = pneg %p209
      %p216 = scmp.eq.s32.totalorder %s22, 1
      %p217 = por %p215, %p216
      %p218 = scmp.ne.s32.totalorder %s210, %s213
      %p219 = scmp.eq.s32.totalorder %s22, 0
      %p220 = por %p218, %p219
      %p221 = scmp.ne.s32.totalorder %s210, %s213
      %p222 = scmp.eq.s32.totalorder %s27, 1
      %p223 = por %p221, %p222
      %p224 = scmp.ne.s32.totalorder %s213, %s214
      %p225 = scmp.eq.s32.totalorder %s27, 0
      %p226 = por %p224, %p225
      %p227 = scmp.ne.s32.totalorder %s213, %s214
      %p228 = scmp.eq.s32.totalorder %s28, 1
      %p229 = por %p227, %p228
      %p231 = scmp.ne.s32.totalorder %s214, %s230
      %p232 = scmp.eq.s32.totalorder %s28, 0
      %p233 = por %p231, %p232
      %p234 = scmp.le.s32.totalorder 1, %s22
      %p235 = scmp.lt.s32.totalorder %s22, 3
      %p236 = pnand %p234, %p235
      %p237 = pneg %p236
      // Predicated region
      $region9: #{gat_forward.1} parent=5 // pred_check
        _
      $region10: #{gat_forward.1} parent=5 // pred_check_branch
        %239 = sbr.rel (%p236) target = $region12
      $region11: #{gat_forward.1} parent=5 // pred_region
        %s240 = ssub.s32 %s22, 1
        // Predicated region
        $region13: #{gat_forward.1} parent=11 // pred_check
          %p241 = pneg %p95
        $region14: #{gat_forward.1} parent=11 // pred_check_branch
          %243 = sbr.rel (%p241) target = $region16
        $region15: #{gat_forward.1} parent=11 // pred_region
          _
        $region16: #{gat_forward.1} parent=11 // pred_fallthru
          _
        // Predicated region
        $region17: #{gat_forward.1} parent=11 // pred_check
          %p244 = pneg %p116
        $region18: #{gat_forward.1} parent=11 // pred_check_branch
          %246 = sbr.rel (%p244) target = $region20
        $region19: #{gat_forward.1} parent=11 // pred_region
          %s248 = ssub.s32 256, 256
          %249 = vsyncadd [#allocation5], %s248
          %s250 = sshll.u32 [#allocation6], 4
          %s251 = int_to_ptr.vmem [resolvable:$true] %s250
          %256 = dma.hbm_to_vmem [thread:$0]  %s3, 256, %s251, [#allocation5], 128, 128, 8
        $region20: #{gat_forward.1} parent=11 // pred_fallthru
          _
        // Predicated region
        $region21: #{gat_forward.1} parent=11 // pred_check
          %p257 = pneg %p137
        $region22: #{gat_forward.1} parent=11 // pred_check_branch
          %259 = sbr.rel (%p257) target = $region24
        $region23: #{gat_forward.1} parent=11 // pred_region
          _
        $region24: #{gat_forward.1} parent=11 // pred_fallthru
          _
        // Predicated region
        $region25: #{gat_forward.1} parent=11 // pred_check
          %p260 = pneg %p158
        $region26: #{gat_forward.1} parent=11 // pred_check_branch
          %262 = sbr.rel (%p260) target = $region28
        $region27: #{gat_forward.1} parent=11 // pred_region
          %s264 = ssub.s32 128, 128
          %265 = vsyncadd [#allocation8], %s264
          %s266 = sshll.u32 [#allocation7], 4
          %s267 = int_to_ptr.vmem [resolvable:$true] %s266
          %272 = dma.hbm_to_vmem [thread:$0]  %s5, 128, %s267, [#allocation8], 64, 64, 4
        $region28: #{gat_forward.1} parent=11 // pred_fallthru
          _
        // Predicated region
        $region29: #{gat_forward.1} parent=11 // pred_check
          %p273 = pneg %p179
        $region30: #{gat_forward.1} parent=11 // pred_check_branch
          %275 = sbr.rel (%p273) target = $region32
        $region31: #{gat_forward.1} parent=11 // pred_region
          %s277 = ssub.s32 64, 64
          %278 = vsyncadd [#allocation8], %s277
          %s280 = sshll.u32 [#allocation9], 4
          %s281 = int_to_ptr.vmem [resolvable:$true] %s280
          %283 = dma.hbm_to_vmem [thread:$0]  %s6, 64, %s281, [#allocation8]
        $region32: #{gat_forward.1} parent=11 // pred_fallthru
          _
        // Predicated region
        $region33: #{gat_forward.1} parent=11 // pred_check
          %p284 = pneg %p200
        $region34: #{gat_forward.1} parent=11 // pred_check_branch
          %286 = sbr.rel (%p284) target = $region36
        $region35: #{gat_forward.1} parent=11 // pred_region
          %s288 = ssub.s32 16, 16
          %289 = vsyncadd [#allocation11], %s288
          %s291 = sshll.u32 [#allocation10], 4
          %s292 = int_to_ptr.vmem [resolvable:$true] %s291
          %294 = dma.hbm_to_vmem [thread:$0]  %s7, 16, %s292, [#allocation11]
        $region36: #{gat_forward.1} parent=11 // pred_fallthru
          _
      $region12: #{gat_forward.1} parent=5 // pred_fallthru
        _
      %p295 = scmp.lt.s32.totalorder %s22, 2
      // Predicated region
      $region37: #{gat_forward.1} parent=5 // pred_check
        %p296 = pneg %p295
      $region38: #{gat_forward.1} parent=5 // pred_check_branch
        %298 = sbr.rel (%p296) target = $region40
      $region39: #{gat_forward.1} parent=5 // pred_region
        // Predicated region
        $region41: #{gat_forward.1} parent=39 // pred_check
          %p299 = pneg %p42
        $region42: #{gat_forward.1} parent=39 // pred_check_branch
          %301 = sbr.rel (%p299) target = $region44
        $region43: #{gat_forward.1} parent=39 // pred_region
          %s302 = sand.u32 %s32, 1
          %s303 = scalar_lea.sflag [#allocation3], %s302
          %s304 = sand.u32 %s32, 1
          %s305 = smul.addr %s304, 8
          %s306 = scalar_lea.vmem [#allocation2], %s305
          %s308 = ssub.s32 128, 128
          %309 = vsyncadd %s303, %s308
          %s310 = smul.addr %s22, 128
          %s311 = scalar_lea.hbm %s0, %s310
          %s313 = sshll.u32 %s306, 4
          %s314 = int_to_ptr.vmem [resolvable:$true] %s313
          %316 = dma.hbm_to_vmem [thread:$0]  %s311, 128, %s314, %s303
        $region44: #{gat_forward.1} parent=39 // pred_fallthru
          _
        // Predicated region
        $region45: #{gat_forward.1} parent=39 // pred_check
          %p317 = pneg %p68
        $region46: #{gat_forward.1} parent=39 // pred_check_branch
          %319 = sbr.rel (%p317) target = $region48
        $region47: #{gat_forward.1} parent=39 // pred_region
          %s320 = sand.u32 %s22, 1
          %s321 = scalar_lea.sflag [#allocation5], %s320
          %s322 = sand.u32 %s58, 1
          %s323 = smul.addr %s322, 8
          %s324 = scalar_lea.vmem [#allocation4], %s323
          %s326 = ssub.s32 128, 128
          %327 = vsyncadd %s321, %s326
          %s328 = smul.addr %s22, 128
          %s329 = scalar_lea.hbm %s1, %s328
          %s331 = sshll.u32 %s324, 4
          %s332 = int_to_ptr.vmem [resolvable:$true] %s331
          %334 = dma.hbm_to_vmem [thread:$0]  %s329, 128, %s332, %s321
        $region48: #{gat_forward.1} parent=39 // pred_fallthru
          _
      $region40: #{gat_forward.1} parent=5 // pred_fallthru
        _
      %p335 = scmp.le.s32.totalorder 1, %s22
      %p336 = scmp.lt.s32.totalorder %s22, 3
      %p337 = pnand %p335, %p336
      %p338 = pneg %p337
      // Predicated region
      $region49: #{gat_forward.1} parent=5 // pred_check
        _
      $region50: #{gat_forward.1} parent=5 // pred_check_branch
        %340 = sbr.rel (%p337) target = $region52
      $region51: #{gat_forward.1} parent=5 // pred_region
        %s341 = ssub.s32 %s22, 1
        %s342 = sand.u32 %s35, 1
        %s343 = scalar_lea.sflag [#allocation3], %s342
        %s344 = sand.u32 %s35, 1
        %s345 = smul.addr %s344, 8
        %s346 = scalar_lea.vmem [#allocation2], %s345
        // Predicated region
        $region53: #{gat_forward.1} parent=51 // pred_check
          %p347 = pneg %p48
        $region54: #{gat_forward.1} parent=51 // pred_check_branch
          %349 = sbr.rel (%p347) target = $region56
        $region55: #{gat_forward.1} parent=51 // pred_region
          %350 = dma.done %s343, 128
        $region56: #{gat_forward.1} parent=51 // pred_fallthru
          _
        %s351 = sand.u32 %s27, 1
        %s352 = scalar_lea.sflag [#allocation5], %s351
        %s353 = sand.u32 %s61, 1
        %s354 = smul.addr %s353, 8
        %s355 = scalar_lea.vmem [#allocation4], %s354
        // Predicated region
        $region57: #{gat_forward.1} parent=51 // pred_check
          %p356 = pneg %p74
        $region58: #{gat_forward.1} parent=51 // pred_check_branch
          %358 = sbr.rel (%p356) target = $region60
        $region59: #{gat_forward.1} parent=51 // pred_region
          %359 = dma.done %s352, 128
        $region60: #{gat_forward.1} parent=51 // pred_fallthru
          _
        // Predicated region
        $region61: #{gat_forward.1} parent=51 // pred_check
          %p360 = pneg %p116
        $region62: #{gat_forward.1} parent=51 // pred_check_branch
          %362 = sbr.rel (%p360) target = $region64
        $region63: #{gat_forward.1} parent=51 // pred_region
          %363 = dma.done [#allocation5], 256
        $region64: #{gat_forward.1} parent=51 // pred_fallthru
          _
        // Predicated region
        $region65: #{gat_forward.1} parent=51 // pred_check
          %p364 = pneg %p158
        $region66: #{gat_forward.1} parent=51 // pred_check_branch
          %366 = sbr.rel (%p364) target = $region68
        $region67: #{gat_forward.1} parent=51 // pred_region
          %367 = dma.done [#allocation8], 128
        $region68: #{gat_forward.1} parent=51 // pred_fallthru
          _
        // Predicated region
        $region69: #{gat_forward.1} parent=51 // pred_check
          %p368 = pneg %p179
        $region70: #{gat_forward.1} parent=51 // pred_check_branch
          %370 = sbr.rel (%p368) target = $region72
        $region71: #{gat_forward.1} parent=51 // pred_region
          %371 = dma.done [#allocation8], 64
        $region72: #{gat_forward.1} parent=51 // pred_fallthru
          _
        // Predicated region
        $region73: #{gat_forward.1} parent=51 // pred_check
          %p372 = pneg %p200
        $region74: #{gat_forward.1} parent=51 // pred_check_branch
          %374 = sbr.rel (%p372) target = $region76
        $region75: #{gat_forward.1} parent=51 // pred_region
          %375 = dma.done [#allocation11], 16
        $region76: #{gat_forward.1} parent=51 // pred_fallthru
          _
        %s376 = sand.u32 %s35, 1
        %s377 = scalar_lea.sflag [#allocation3], %s376
        %s378 = sand.u32 %s35, 1
        %s379 = smul.addr %s378, 8
        %s380 = scalar_lea.vmem [#allocation2], %s379
        %p381 = pneg %p48
        %p382 = pneg %p45
        %s383 = sand.u32 %s27, 1
        %s384 = scalar_lea.sflag [#allocation5], %s383
        %s385 = sand.u32 %s61, 1
        %s386 = smul.addr %s385, 8
        %s387 = scalar_lea.vmem [#allocation4], %s386
        %p388 = pneg %p74
        %p389 = pneg %p71
        %p390 = pneg %p95
        %p391 = pneg %p92
        %p392 = pneg %p116
        %p393 = pneg %p113
        %p394 = pneg %p137
        %p395 = pneg %p134
        %p396 = pneg %p158
        %p397 = pneg %p155
        %p398 = pneg %p179
        %p399 = pneg %p176
        %p400 = pneg %p200
        %p401 = pneg %p197
        %p402 = pneg %p226
        %p403 = pneg %p223
        %p404 = scmp.lt.s32.totalorder %s27, 1
        %s405 = scalar_select %p404, %s27, 1
        %s406 = smul.addr %s405, 8
        %s407 = scalar_lea.vmem %s8, %s406
        %p408 = scmp.lt.s32.totalorder %s27, 1
        %s409 = scalar_select %p408, %s27, 1
        %s410 = smul.addr %s409, 8
        %s411 = scalar_lea.vmem %s8, %s410
        %v414 = vld [vmem:[%s355] sm:$0xff]
        %vm415 = vcmp.gt.f32.partialorder %v414, 0.0
        %v416 = vld [vmem:[%s346] sm:$0xff]
        %v417 = vpack.c.bf16 %v416, %v416
        %v418 = vld [vmem:[%s2] sm:$0xf]
        %v419 = vld [vmem:[%s2 + $0x4] sm:$0xf]
        %v422 = vunpack.c.l.b16 %v418
        %v423 = vunpack.c.l.b16 %v419
        %v424 = vpack.c.b16 %v423, %v422
        %vm426 = vcmask 130048
        %v428 = vsel %vm426, %v417, 0
        %430 = vmatprep.subr.bf16.mxu0 0
        %431 = vmatpush1.bf16.msra.mxu0 0
        %432 = vmatprep.subr.bf16.mxu0 0
        %433 = vmatpush1.bf16.msra.mxu0 0
        %434 = vmatprep.subr.bf16.mxu0 0
        %435 = vmatpush1.bf16.msra.mxu0 0
        %436 = vmatprep.subr.bf16.mxu0 0
        %437 = vmatpush1.bf16.msra.mxu0 0
        %438 = vmatprep.subr.bf16.mxu0 0
        %439 = vmatpush1.bf16.msra.mxu0 0
        %440 = vmatprep.subr.bf16.mxu0 0
        %441 = vmatpush1.bf16.msra.mxu0 0
        %442 = vmatprep.subr.bf16.mxu0 0
        %443 = vmatpush1.bf16.msra.mxu0 0
        %444 = vmatprep.subr.bf16.mxu0 0
        %445 = vmatpush1.bf16.msra.mxu0 %v424
        %446 = vmatprep.subr.bf16.mxu0 0
        %447 = vmatpush2.bf16.msra.mxu0 0
        %448 = vmatprep.subr.bf16.mxu0 0
        %449 = vmatpush2.bf16.msra.mxu0 0
        %450 = vmatprep.subr.bf16.mxu0 0
        %451 = vmatpush2.bf16.msra.mxu0 0
        %452 = vmatprep.subr.bf16.mxu0 0
        %453 = vmatpush2.bf16.msra.mxu0 0
        %454 = vmatprep.subr.bf16.mxu0 0
        %455 = vmatpush2.bf16.msra.mxu0 0
        %456 = vmatprep.subr.bf16.mxu0 0
        %457 = vmatpush2.bf16.msra.mxu0 0
        %458 = vmatprep.subr.bf16.mxu0 0
        %459 = vmatpush2.bf16.msra.mxu0 0
        %460 = vmatprep.subr.bf16.mxu0 0
        %461 = vmatpush2.bf16.msra.mxu0 0
        %462 = vmatprep.mubr.bf16.mxu0 0
        %463 = vmatmul.mubr.bf16.gmra.mxu0 %v428
        %v464 = vpop.f32.mrf.mxu0
        %v465 = vadd.f32 0.0, %v464
        %v466 = vpop.f32.mrf.mxu0
        %v467 = vpop.f32.mrf.mxu0
        %v468 = vpop.f32.mrf.mxu0
        %469 = vdwg.mxu0
        %v470 = vld [vmem:[#allocation6] sm:$0xff]
        %v471 = vld [vmem:[#allocation6 + $0x8] sm:$0xff]
        %v473 = vsel %vm426, %v465, 0
        %475 = vmatprep.subr.mxu0 0.0
        %476 = vmatpush1.msra.mxu0 0.0
        %477 = vmatprep.subr.mxu0 0.0
        %478 = vmatpush1.msra.mxu0 0.0
        %479 = vmatprep.subr.mxu0 0.0
        %480 = vmatpush1.msra.mxu0 0.0
        %481 = vmatprep.subr.mxu0 0.0
        %482 = vmatpush1.msra.mxu0 0.0
        %483 = vmatprep.subr.mxu0 0.0
        %484 = vmatpush1.msra.mxu0 0.0
        %485 = vmatprep.subr.mxu0 0.0
        %486 = vmatpush1.msra.mxu0 0.0
        %487 = vmatprep.subr.mxu0 0.0
        %488 = vmatpush1.msra.mxu0 0.0
        %489 = vmatprep.subr.mxu0 0.0
        %490 = vmatpush1.msra.mxu0 0.0
        %491 = vmatprep.subr.mxu0 0.0
        %492 = vmatpush1.msra.mxu0 0.0
        %493 = vmatprep.subr.mxu0 0.0
        %494 = vmatpush1.msra.mxu0 0.0
        %495 = vmatprep.subr.mxu0 0.0
        %496 = vmatpush1.msra.mxu0 0.0
        %497 = vmatprep.subr.mxu0 0.0
        %498 = vmatpush1.msra.mxu0 0.0
        %499 = vmatprep.subr.mxu0 0.0
        %500 = vmatpush1.msra.mxu0 0.0
        %501 = vmatprep.subr.mxu0 0.0
        %502 = vmatpush1.msra.mxu0 0.0
        %503 = vmatprep.subr.mxu0 0.0
        %504 = vmatpush1.msra.mxu0 %v471
        %505 = vmatprep.subr.mxu0 0.0
        %506 = vmatpush1.msra.mxu0 %v470
        %507 = vmatprep.subr.mxu0 0.0
        %508 = vmatpush2.msra.mxu0 0.0
        %509 = vmatprep.subr.mxu0 0.0
        %510 = vmatpush2.msra.mxu0 0.0
        %511 = vmatprep.subr.mxu0 0.0
        %512 = vmatpush2.msra.mxu0 0.0
        %513 = vmatprep.subr.mxu0 0.0
        %514 = vmatpush2.msra.mxu0 0.0
        %515 = vmatprep.subr.mxu0 0.0
        %516 = vmatpush2.msra.mxu0 0.0
        %517 = vmatprep.subr.mxu0 0.0
        %518 = vmatpush2.msra.mxu0 0.0
        %519 = vmatprep.subr.mxu0 0.0
        %520 = vmatpush2.msra.mxu0 0.0
        %521 = vmatprep.subr.mxu0 0.0
        %522 = vmatpush2.msra.mxu0 0.0
        %523 = vmatprep.subr.mxu0 0.0
        %524 = vmatpush2.msra.mxu0 0.0
        %525 = vmatprep.subr.mxu0 0.0
        %526 = vmatpush2.msra.mxu0 0.0
        %527 = vmatprep.subr.mxu0 0.0
        %528 = vmatpush2.msra.mxu0 0.0
        %529 = vmatprep.subr.mxu0 0.0
        %530 = vmatpush2.msra.mxu0 0.0
        %531 = vmatprep.subr.mxu0 0.0
        %532 = vmatpush2.msra.mxu0 0.0
        %533 = vmatprep.subr.mxu0 0.0
        %534 = vmatpush2.msra.mxu0 0.0
        %535 = vmatprep.subr.mxu0 0.0
        %536 = vmatpush2.msra.mxu0 0.0
        %537 = vmatprep.subr.mxu0 0.0
        %538 = vmatpush2.msra.mxu0 0.0
        %539 = vmatprep.mubr.f32.mxu0 0.0
        %540 = vmatmul.mubr.f32.gmra.mxu0 %v473
        %v541 = vpop.f32.mrf.mxu0
        %v542 = vadd.f32 0.0, %v541
        %v543 = vpop.f32.mrf.mxu0
        %544 = vdwg.mxu0
        %v545 = vld [vmem:[%s4] sm:$0x3]
        %v546 = vld [vmem:[#allocation7] sm:$0xf]
        %v547 = vld [vmem:[#allocation7 + $0x4] sm:$0xf]
        %vm548 = vcmask 64512
        %v550 = vsel %vm548, %v545, 0
        %v552 = vsel %vm548, %v465, 0
        %554 = vmatprep.subr.mxu0 0.0
        %555 = vmatpush1.xpose.msra.mxu0 0.0
        %556 = vmatprep.subr.mxu0 0.0
        %557 = vmatpush1.xpose.msra.mxu0 0.0
        %558 = vmatprep.subr.mxu0 0.0
        %559 = vmatpush1.xpose.msra.mxu0 0.0
        %560 = vmatprep.subr.mxu0 0.0
        %561 = vmatpush1.xpose.msra.mxu0 0.0
        %562 = vmatprep.subr.mxu0 0.0
        %563 = vmatpush1.xpose.msra.mxu0 0.0
        %564 = vmatprep.subr.mxu0 0.0
        %565 = vmatpush1.xpose.msra.mxu0 0.0
        %566 = vmatprep.subr.mxu0 0.0
        %567 = vmatpush1.xpose.msra.mxu0 0.0
        %568 = vmatprep.subr.mxu0 0.0
        %569 = vmatpush1.xpose.msra.mxu0 0.0
        %570 = vmatprep.subr.mxu0 0.0
        %571 = vmatpush1.xpose.msra.mxu0 0.0
        %572 = vmatprep.subr.mxu0 0.0
        %573 = vmatpush1.xpose.msra.mxu0 0.0
        %574 = vmatprep.subr.mxu0 0.0
        %575 = vmatpush1.xpose.msra.mxu0 0.0
        %576 = vmatprep.subr.mxu0 0.0
        %577 = vmatpush1.xpose.msra.mxu0 0.0
        %578 = vmatprep.subr.mxu0 0.0
        %579 = vmatpush1.xpose.msra.mxu0 0.0
        %580 = vmatprep.subr.mxu0 0.0
        %581 = vmatpush1.xpose.msra.mxu0 0.0
        %582 = vmatprep.subr.mxu0 0.0
        %583 = vmatpush1.xpose.msra.mxu0 0.0
        %584 = vmatprep.subr.mxu0 0.0
        %585 = vmatpush1.xpose.msra.mxu0 %v552
        %586 = vmatprep.subr.mxu0 0.0
        %587 = vmatpush2.xpose.msra.mxu0 0.0
        %588 = vmatprep.subr.mxu0 0.0
        %589 = vmatpush2.xpose.msra.mxu0 0.0
        %590 = vmatprep.subr.mxu0 0.0
        %591 = vmatpush2.xpose.msra.mxu0 0.0
        %592 = vmatprep.subr.mxu0 0.0
        %593 = vmatpush2.xpose.msra.mxu0 0.0
        %594 = vmatprep.subr.mxu0 0.0
        %595 = vmatpush2.xpose.msra.mxu0 0.0
        %596 = vmatprep.subr.mxu0 0.0
        %597 = vmatpush2.xpose.msra.mxu0 0.0
        %598 = vmatprep.subr.mxu0 0.0
        %599 = vmatpush2.xpose.msra.mxu0 0.0
        %600 = vmatprep.subr.mxu0 0.0
        %601 = vmatpush2.xpose.msra.mxu0 0.0
        %602 = vmatprep.subr.mxu0 0.0
        %603 = vmatpush2.xpose.msra.mxu0 0.0
        %604 = vmatprep.subr.mxu0 0.0
        %605 = vmatpush2.xpose.msra.mxu0 0.0
        %606 = vmatprep.subr.mxu0 0.0
        %607 = vmatpush2.xpose.msra.mxu0 0.0
        %608 = vmatprep.subr.mxu0 0.0
        %609 = vmatpush2.xpose.msra.mxu0 0.0
        %610 = vmatprep.subr.mxu0 0.0
        %611 = vmatpush2.xpose.msra.mxu0 0.0
        %612 = vmatprep.subr.mxu0 0.0
        %613 = vmatpush2.xpose.msra.mxu0 0.0
        %614 = vmatprep.subr.mxu0 0.0
        %615 = vmatpush2.xpose.msra.mxu0 0.0
        %616 = vmatprep.subr.mxu0 0.0
        %617 = vmatpush2.xpose.msra.mxu0 0.0
        %618 = vmatprep.mubr.f32.mxu0 0.0
        %619 = vmatmul.mubr.f32.gmra.mxu0 %v550
        %v620 = vpop.f32.mrf.mxu0
        %v621 = vadd.f32 0.0, %v620
        %v622 = vpop.f32.mrf.mxu0
        %623 = vdwg.mxu0
        %625 = vset.pattern.permute.xlu0 0
        %626 = vperm.xlu0 %625, %v542
        %v627 = vpop.permute.xlu0 %626
        %v629 = vlaneseq
        %v630 = vshrl.u32 %v629, 7
        %v631 = vsub.s32 0, %v630
        %v632 = vrot.slane %v621, %v631
        %v633 = vadd.f32 %v627, %v632
        %vm634 = vcmp.gt.f32.partialorder %v633, 0.0
        %v635 = vmul.f32 %v633, 0.2
        %v636 = vsel %vm634, %v633, %v635
        %v637 = vsel %vm415, %v636, -9e+15
        %v638 = vsel %vm548, %v637, -inf
        %639 = vmax.xlane.f32.xlu0 %v638
        %v640 = vpop.xlane.xlu0 %639
        %v641 = vsub.f32 %v637, %v640
        %v642 = vmul.f32 %v641, 1.442695
        %v643 = vpow.pop %v642
        %v644 = vpack.c.bf16 %v465, %v465
        %v647 = vsel %vm548, %v644, 1065369472
        %v648 = vpack.c.bf16 %v643, %v643
        %v650 = vsel %vm548, %v648, 0
        %vm652 = vcmask 1043456
        %v653 = vsel %vm652, %v647, 0
        %655 = vmatprep.subr.bf16.mxu0 0
        %656 = vmatpush1.bf16.msra.mxu0 0
        %657 = vmatprep.subr.bf16.mxu0 0
        %658 = vmatpush1.bf16.msra.mxu0 0
        %659 = vmatprep.subr.bf16.mxu0 0
        %660 = vmatpush1.bf16.msra.mxu0 0
        %661 = vmatprep.subr.bf16.mxu0 0
        %662 = vmatpush1.bf16.msra.mxu0 0
        %663 = vmatprep.subr.bf16.mxu0 0
        %664 = vmatpush1.bf16.msra.mxu0 0
        %665 = vmatprep.subr.bf16.mxu0 0
        %666 = vmatpush1.bf16.msra.mxu0 0
        %667 = vmatprep.subr.bf16.mxu0 0
        %668 = vmatpush1.bf16.msra.mxu0 0
        %669 = vmatprep.subr.bf16.mxu0 0
        %670 = vmatpush1.bf16.msra.mxu0 %v653
        %671 = vmatprep.subr.bf16.mxu0 0
        %672 = vmatpush2.bf16.msra.mxu0 0
        %673 = vmatprep.subr.bf16.mxu0 0
        %674 = vmatpush2.bf16.msra.mxu0 0
        %675 = vmatprep.subr.bf16.mxu0 0
        %676 = vmatpush2.bf16.msra.mxu0 0
        %677 = vmatprep.subr.bf16.mxu0 0
        %678 = vmatpush2.bf16.msra.mxu0 0
        %679 = vmatprep.subr.bf16.mxu0 0
        %680 = vmatpush2.bf16.msra.mxu0 0
        %681 = vmatprep.subr.bf16.mxu0 0
        %682 = vmatpush2.bf16.msra.mxu0 0
        %683 = vmatprep.subr.bf16.mxu0 0
        %684 = vmatpush2.bf16.msra.mxu0 0
        %685 = vmatprep.subr.bf16.mxu0 0
        %686 = vmatpush2.bf16.msra.mxu0 0
        %687 = vmatprep.mubr.bf16.mxu0 0
        %688 = vmatmul.mubr.bf16.gmra.mxu0 %v650
        %v689 = vpop.f32.mrf.mxu0
        %v690 = vadd.f32 0.0, %v689
        %v691 = vpop.f32.mrf.mxu0
        %v692 = vpop.f32.mrf.mxu0
        %v693 = vpop.f32.mrf.mxu0
        %694 = vdwg.mxu0
        %v695 = vrcp.pop %v690
        %697 = vset.pattern.permute.xlu0 8
        %698 = vperm.xlu0 %697, %v695
        %v699 = vpop.permute.xlu0 %698
        %v701 = vmul.f32 %v690, %v699
        %vm702 = vcmp.gt.f32.partialorder %v701, 0.0
        %v703 = vmin.f32 %v701, 0.0
        %v704 = vmul.f32 %v703, 1.442695
        %v705 = vpow.pop %v704
        %v706 = vsub.f32 %v705, 1.0
        %v707 = vsel %vm702, %v701, %v706
        %v708 = vpack.c.bf16 %v707, %v707
        %v709 = vrot.slane %v545, 1
        %710 = vrot.lane.b32.xlu0 %v465, 120
        %v711 = vpop.permute.xlu0 %710
        %v712 = vsel %vm548, %v709, 0
        %v714 = vsel %vm548, %v711, 0
        %716 = vmatprep.subr.mxu0 0.0
        %717 = vmatpush1.xpose.msra.mxu0 0.0
        %718 = vmatprep.subr.mxu0 0.0
        %719 = vmatpush1.xpose.msra.mxu0 0.0
        %720 = vmatprep.subr.mxu0 0.0
        %721 = vmatpush1.xpose.msra.mxu0 0.0
        %722 = vmatprep.subr.mxu0 0.0
        %723 = vmatpush1.xpose.msra.mxu0 0.0
        %724 = vmatprep.subr.mxu0 0.0
        %725 = vmatpush1.xpose.msra.mxu0 0.0
        %726 = vmatprep.subr.mxu0 0.0
        %727 = vmatpush1.xpose.msra.mxu0 0.0
        %728 = vmatprep.subr.mxu0 0.0
        %729 = vmatpush1.xpose.msra.mxu0 0.0
        %730 = vmatprep.subr.mxu0 0.0
        %731 = vmatpush1.xpose.msra.mxu0 0.0
        %732 = vmatprep.subr.mxu0 0.0
        %733 = vmatpush1.xpose.msra.mxu0 0.0
        %734 = vmatprep.subr.mxu0 0.0
        %735 = vmatpush1.xpose.msra.mxu0 0.0
        %736 = vmatprep.subr.mxu0 0.0
        %737 = vmatpush1.xpose.msra.mxu0 0.0
        %738 = vmatprep.subr.mxu0 0.0
        %739 = vmatpush1.xpose.msra.mxu0 0.0
        %740 = vmatprep.subr.mxu0 0.0
        %741 = vmatpush1.xpose.msra.mxu0 0.0
        %742 = vmatprep.subr.mxu0 0.0
        %743 = vmatpush1.xpose.msra.mxu0 0.0
        %744 = vmatprep.subr.mxu0 0.0
        %745 = vmatpush1.xpose.msra.mxu0 0.0
        %746 = vmatprep.subr.mxu0 0.0
        %747 = vmatpush1.xpose.msra.mxu0 %v714
        %748 = vmatprep.subr.mxu0 0.0
        %749 = vmatpush2.xpose.msra.mxu0 0.0
        %750 = vmatprep.subr.mxu0 0.0
        %751 = vmatpush2.xpose.msra.mxu0 0.0
        %752 = vmatprep.subr.mxu0 0.0
        %753 = vmatpush2.xpose.msra.mxu0 0.0
        %754 = vmatprep.subr.mxu0 0.0
        %755 = vmatpush2.xpose.msra.mxu0 0.0
        %756 = vmatprep.subr.mxu0 0.0
        %757 = vmatpush2.xpose.msra.mxu0 0.0
        %758 = vmatprep.subr.mxu0 0.0
        %759 = vmatpush2.xpose.msra.mxu0 0.0
        %760 = vmatprep.subr.mxu0 0.0
        %761 = vmatpush2.xpose.msra.mxu0 0.0
        %762 = vmatprep.subr.mxu0 0.0
        %763 = vmatpush2.xpose.msra.mxu0 0.0
        %764 = vmatprep.subr.mxu0 0.0
        %765 = vmatpush2.xpose.msra.mxu0 0.0
        %766 = vmatprep.subr.mxu0 0.0
        %767 = vmatpush2.xpose.msra.mxu0 0.0
        %768 = vmatprep.subr.mxu0 0.0
        %769 = vmatpush2.xpose.msra.mxu0 0.0
        %770 = vmatprep.subr.mxu0 0.0
        %771 = vmatpush2.xpose.msra.mxu0 0.0
        %772 = vmatprep.subr.mxu0 0.0
        %773 = vmatpush2.xpose.msra.mxu0 0.0
        %774 = vmatprep.subr.mxu0 0.0
        %775 = vmatpush2.xpose.msra.mxu0 0.0
        %776 = vmatprep.subr.mxu0 0.0
        %777 = vmatpush2.xpose.msra.mxu0 0.0
        %778 = vmatprep.subr.mxu0 0.0
        %779 = vmatpush2.xpose.msra.mxu0 0.0
        %780 = vmatprep.mubr.f32.mxu0 0.0
        %781 = vmatmul.mubr.f32.gmra.mxu0 %v712
        %v782 = vpop.f32.mrf.mxu0
        %v783 = vadd.f32 0.0, %v782
        %v784 = vpop.f32.mrf.mxu0
        %785 = vdwg.mxu0
        %786 = vset.pattern.permute.xlu0 1
        %787 = vperm.xlu0 %786, %v542
        %v788 = vpop.permute.xlu0 %787
        %v790 = vlaneseq
        %v791 = vshrl.u32 %v790, 7
        %v792 = vsub.s32 0, %v791
        %v793 = vrot.slane %v783, %v792
        %v794 = vadd.f32 %v788, %v793
        %vm795 = vcmp.gt.f32.partialorder %v794, 0.0
        %v796 = vmul.f32 %v794, 0.2
        %v797 = vsel %vm795, %v794, %v796
        %v798 = vsel %vm415, %v797, -9e+15
        %v799 = vsel %vm548, %v798, -inf
        %800 = vmax.xlane.f32.xlu0 %v799
        %v801 = vpop.xlane.xlu0 %800
        %v802 = vsub.f32 %v798, %v801
        %v803 = vmul.f32 %v802, 1.442695
        %v804 = vpow.pop %v803
        %806 = vrot.lane.b32.xlu0 %v644, 120
        %v807 = vpop.permute.xlu0 %806
        %v809 = vsel %vm548, %v807, 1065369472
        %v810 = vpack.c.bf16 %v804, %v804
        %v812 = vsel %vm548, %v810, 0
        %v814 = vsel %vm652, %v809, 0
        %816 = vmatprep.subr.bf16.mxu0 0
        %817 = vmatpush1.bf16.msra.mxu0 0
        %818 = vmatprep.subr.bf16.mxu0 0
        %819 = vmatpush1.bf16.msra.mxu0 0
        %820 = vmatprep.subr.bf16.mxu0 0
        %821 = vmatpush1.bf16.msra.mxu0 0
        %822 = vmatprep.subr.bf16.mxu0 0
        %823 = vmatpush1.bf16.msra.mxu0 0
        %824 = vmatprep.subr.bf16.mxu0 0
        %825 = vmatpush1.bf16.msra.mxu0 0
        %826 = vmatprep.subr.bf16.mxu0 0
        %827 = vmatpush1.bf16.msra.mxu0 0
        %828 = vmatprep.subr.bf16.mxu0 0
        %829 = vmatpush1.bf16.msra.mxu0 0
        %830 = vmatprep.subr.bf16.mxu0 0
        %831 = vmatpush1.bf16.msra.mxu0 %v814
        %832 = vmatprep.subr.bf16.mxu0 0
        %833 = vmatpush2.bf16.msra.mxu0 0
        %834 = vmatprep.subr.bf16.mxu0 0
        %835 = vmatpush2.bf16.msra.mxu0 0
        %836 = vmatprep.subr.bf16.mxu0 0
        %837 = vmatpush2.bf16.msra.mxu0 0
        %838 = vmatprep.subr.bf16.mxu0 0
        %839 = vmatpush2.bf16.msra.mxu0 0
        %840 = vmatprep.subr.bf16.mxu0 0
        %841 = vmatpush2.bf16.msra.mxu0 0
        %842 = vmatprep.subr.bf16.mxu0 0
        %843 = vmatpush2.bf16.msra.mxu0 0
        %844 = vmatprep.subr.bf16.mxu0 0
        %845 = vmatpush2.bf16.msra.mxu0 0
        %846 = vmatprep.subr.bf16.mxu0 0
        %847 = vmatpush2.bf16.msra.mxu0 0
        %848 = vmatprep.mubr.bf16.mxu0 0
        %849 = vmatmul.mubr.bf16.gmra.mxu0 %v812
        %v850 = vpop.f32.mrf.mxu0
        %v851 = vadd.f32 0.0, %v850
        %v852 = vpop.f32.mrf.mxu0
        %v853 = vpop.f32.mrf.mxu0
        %v854 = vpop.f32.mrf.mxu0
        %855 = vdwg.mxu0
        %v856 = vrcp.pop %v851
        %858 = vset.pattern.permute.xlu0 8
        %859 = vperm.xlu0 %858, %v856
        %v860 = vpop.permute.xlu0 %859
        %v862 = vmul.f32 %v851, %v860
        %vm863 = vcmp.gt.f32.partialorder %v862, 0.0
        %v864 = vmin.f32 %v862, 0.0
        %v865 = vmul.f32 %v864, 1.442695
        %v866 = vpow.pop %v865
        %v867 = vsub.f32 %v866, 1.0
        %v868 = vsel %vm863, %v862, %v867
        %v869 = vpack.c.bf16 %v868, %v868
        %v871 = vsel %vm548, %v869, 0
        %v874 = vsel %vm652, %v547, 0
        %876 = vmatprep.subr.bf16.mxu0 0
        %877 = vmatpush1.bf16.msra.mxu0 0
        %878 = vmatprep.subr.bf16.mxu0 0
        %879 = vmatpush1.bf16.msra.mxu0 0
        %880 = vmatprep.subr.bf16.mxu0 0
        %881 = vmatpush1.bf16.msra.mxu0 0
        %882 = vmatprep.subr.bf16.mxu0 0
        %883 = vmatpush1.bf16.msra.mxu0 0
        %884 = vmatprep.subr.bf16.mxu0 0
        %885 = vmatpush1.bf16.msra.mxu0 0
        %886 = vmatprep.subr.bf16.mxu0 0
        %887 = vmatpush1.bf16.msra.mxu0 0
        %888 = vmatprep.subr.bf16.mxu0 0
        %889 = vmatpush1.bf16.msra.mxu0 0
        %890 = vmatprep.subr.bf16.mxu0 0
        %891 = vmatpush1.bf16.msra.mxu0 %v874
        %892 = vmatprep.subr.bf16.mxu0 0
        %893 = vmatpush2.bf16.msra.mxu0 0
        %894 = vmatprep.subr.bf16.mxu0 0
        %895 = vmatpush2.bf16.msra.mxu0 0
        %896 = vmatprep.subr.bf16.mxu0 0
        %897 = vmatpush2.bf16.msra.mxu0 0
        %898 = vmatprep.subr.bf16.mxu0 0
        %899 = vmatpush2.bf16.msra.mxu0 0
        %900 = vmatprep.subr.bf16.mxu0 0
        %901 = vmatpush2.bf16.msra.mxu0 0
        %902 = vmatprep.subr.bf16.mxu0 0
        %903 = vmatpush2.bf16.msra.mxu0 0
        %904 = vmatprep.subr.bf16.mxu0 0
        %905 = vmatpush2.bf16.msra.mxu0 0
        %906 = vmatprep.subr.bf16.mxu0 0
        %907 = vmatpush2.bf16.msra.mxu0 0
        %908 = vmatprep.mubr.bf16.mxu0 0
        %909 = vmatmul.mubr.bf16.gmra.mxu0 %v871
        %v910 = vpop.f32.mrf.mxu0
        %v911 = vadd.f32 0.0, %v910
        %v912 = vpop.f32.mrf.mxu0
        %v913 = vpop.f32.mrf.mxu0
        %v914 = vpop.f32.mrf.mxu0
        %915 = vdwg.mxu0
        %v917 = vsel %vm548, %v708, 0
        %v920 = vsel %vm652, %v546, 0
        %922 = vmatprep.subr.bf16.mxu0 0
        %923 = vmatpush1.bf16.msra.mxu0 0
        %924 = vmatprep.subr.bf16.mxu0 0
        %925 = vmatpush1.bf16.msra.mxu0 0
        %926 = vmatprep.subr.bf16.mxu0 0
        %927 = vmatpush1.bf16.msra.mxu0 0
        %928 = vmatprep.subr.bf16.mxu0 0
        %929 = vmatpush1.bf16.msra.mxu0 0
        %930 = vmatprep.subr.bf16.mxu0 0
        %931 = vmatpush1.bf16.msra.mxu0 0
        %932 = vmatprep.subr.bf16.mxu0 0
        %933 = vmatpush1.bf16.msra.mxu0 0
        %934 = vmatprep.subr.bf16.mxu0 0
        %935 = vmatpush1.bf16.msra.mxu0 0
        %936 = vmatprep.subr.bf16.mxu0 0
        %937 = vmatpush1.bf16.msra.mxu0 %v920
        %938 = vmatprep.subr.bf16.mxu0 0
        %939 = vmatpush2.bf16.msra.mxu0 0
        %940 = vmatprep.subr.bf16.mxu0 0
        %941 = vmatpush2.bf16.msra.mxu0 0
        %942 = vmatprep.subr.bf16.mxu0 0
        %943 = vmatpush2.bf16.msra.mxu0 0
        %944 = vmatprep.subr.bf16.mxu0 0
        %945 = vmatpush2.bf16.msra.mxu0 0
        %946 = vmatprep.subr.bf16.mxu0 0
        %947 = vmatpush2.bf16.msra.mxu0 0
        %948 = vmatprep.subr.bf16.mxu0 0
        %949 = vmatpush2.bf16.msra.mxu0 0
        %950 = vmatprep.subr.bf16.mxu0 0
        %951 = vmatpush2.bf16.msra.mxu0 0
        %952 = vmatprep.subr.bf16.mxu0 0
        %953 = vmatpush2.bf16.msra.mxu0 0
        %954 = vmatprep.mubr.bf16.mxu0 0
        %955 = vmatmul.mubr.bf16.gmra.mxu0 %v917
        %v956 = vpop.f32.mrf.mxu0
        %v957 = vadd.f32 %v911, %v956
        %v958 = vpop.f32.mrf.mxu0
        %v959 = vpop.f32.mrf.mxu0
        %v960 = vpop.f32.mrf.mxu0
        %961 = vdwg.mxu0
        %v962 = vld [vmem:[#allocation9] sm:$0xf]
        %vm963 = vcmask 31744
        %v965 = vsel %vm963, %v957, 0
        %v968 = vsel %vm652, %v962, 0
        %970 = vmatprep.subr.mxu0 0.0
        %971 = vmatpush1.msra.mxu0 0.0
        %972 = vmatprep.subr.mxu0 0.0
        %973 = vmatpush1.msra.mxu0 0.0
        %974 = vmatprep.subr.mxu0 0.0
        %975 = vmatpush1.msra.mxu0 0.0
        %976 = vmatprep.subr.mxu0 0.0
        %977 = vmatpush1.msra.mxu0 0.0
        %978 = vmatprep.subr.mxu0 0.0
        %979 = vmatpush1.msra.mxu0 0.0
        %980 = vmatprep.subr.mxu0 0.0
        %981 = vmatpush1.msra.mxu0 0.0
        %982 = vmatprep.subr.mxu0 0.0
        %983 = vmatpush1.msra.mxu0 0.0
        %984 = vmatprep.subr.mxu0 0.0
        %985 = vmatpush1.msra.mxu0 0.0
        %986 = vmatprep.subr.mxu0 0.0
        %987 = vmatpush1.msra.mxu0 0.0
        %988 = vmatprep.subr.mxu0 0.0
        %989 = vmatpush1.msra.mxu0 0.0
        %990 = vmatprep.subr.mxu0 0.0
        %991 = vmatpush1.msra.mxu0 0.0
        %992 = vmatprep.subr.mxu0 0.0
        %993 = vmatpush1.msra.mxu0 0.0
        %994 = vmatprep.subr.mxu0 0.0
        %995 = vmatpush1.msra.mxu0 0.0
        %996 = vmatprep.subr.mxu0 0.0
        %997 = vmatpush1.msra.mxu0 0.0
        %998 = vmatprep.subr.mxu0 0.0
        %999 = vmatpush1.msra.mxu0 0.0
        %1000 = vmatprep.subr.mxu0 0.0
        %1001 = vmatpush1.msra.mxu0 %v968
        %1002 = vmatprep.subr.mxu0 0.0
        %1003 = vmatpush2.msra.mxu0 0.0
        %1004 = vmatprep.subr.mxu0 0.0
        %1005 = vmatpush2.msra.mxu0 0.0
        %1006 = vmatprep.subr.mxu0 0.0
        %1007 = vmatpush2.msra.mxu0 0.0
        %1008 = vmatprep.subr.mxu0 0.0
        %1009 = vmatpush2.msra.mxu0 0.0
        %1010 = vmatprep.subr.mxu0 0.0
        %1011 = vmatpush2.msra.mxu0 0.0
        %1012 = vmatprep.subr.mxu0 0.0
        %1013 = vmatpush2.msra.mxu0 0.0
        %1014 = vmatprep.subr.mxu0 0.0
        %1015 = vmatpush2.msra.mxu0 0.0
        %1016 = vmatprep.subr.mxu0 0.0
        %1017 = vmatpush2.msra.mxu0 0.0
        %1018 = vmatprep.subr.mxu0 0.0
        %1019 = vmatpush2.msra.mxu0 0.0
        %1020 = vmatprep.subr.mxu0 0.0
        %1021 = vmatpush2.msra.mxu0 0.0
        %1022 = vmatprep.subr.mxu0 0.0
        %1023 = vmatpush2.msra.mxu0 0.0
        %1024 = vmatprep.subr.mxu0 0.0
        %1025 = vmatpush2.msra.mxu0 0.0
        %1026 = vmatprep.subr.mxu0 0.0
        %1027 = vmatpush2.msra.mxu0 0.0
        %1028 = vmatprep.subr.mxu0 0.0
        %1029 = vmatpush2.msra.mxu0 0.0
        %1030 = vmatprep.subr.mxu0 0.0
        %1031 = vmatpush2.msra.mxu0 0.0
        %1032 = vmatprep.subr.mxu0 0.0
        %1033 = vmatpush2.msra.mxu0 0.0
        %1034 = vmatprep.mubr.f32.mxu0 0.0
        %1035 = vmatmul.mubr.f32.gmra.mxu0 %v965
        %v1036 = vpop.f32.mrf.mxu0
        %v1037 = vadd.f32 0.0, %v1036
        %v1038 = vpop.f32.mrf.mxu0
        %1039 = vdwg.mxu0
        %v1040 = vld [vmem:[#allocation10] sm:$0x1]
        %v1042 = vsel %vm963, %v1040, 0
        %1044 = vmatprep.subr.mxu0 0.0
        %1045 = vmatpush1.xpose.msra.mxu0 0.0
        %1046 = vmatprep.subr.mxu0 0.0
        %1047 = vmatpush1.xpose.msra.mxu0 0.0
        %1048 = vmatprep.subr.mxu0 0.0
        %1049 = vmatpush1.xpose.msra.mxu0 0.0
        %1050 = vmatprep.subr.mxu0 0.0
        %1051 = vmatpush1.xpose.msra.mxu0 0.0
        %1052 = vmatprep.subr.mxu0 0.0
        %1053 = vmatpush1.xpose.msra.mxu0 0.0
        %1054 = vmatprep.subr.mxu0 0.0
        %1055 = vmatpush1.xpose.msra.mxu0 0.0
        %1056 = vmatprep.subr.mxu0 0.0
        %1057 = vmatpush1.xpose.msra.mxu0 0.0
        %1058 = vmatprep.subr.mxu0 0.0
        %1059 = vmatpush1.xpose.msra.mxu0 0.0
        %1060 = vmatprep.subr.mxu0 0.0
        %1061 = vmatpush1.xpose.msra.mxu0 0.0
        %1062 = vmatprep.subr.mxu0 0.0
        %1063 = vmatpush1.xpose.msra.mxu0 0.0
        %1064 = vmatprep.subr.mxu0 0.0
        %1065 = vmatpush1.xpose.msra.mxu0 0.0
        %1066 = vmatprep.subr.mxu0 0.0
        %1067 = vmatpush1.xpose.msra.mxu0 0.0
        %1068 = vmatprep.subr.mxu0 0.0
        %1069 = vmatpush1.xpose.msra.mxu0 0.0
        %1070 = vmatprep.subr.mxu0 0.0
        %1071 = vmatpush1.xpose.msra.mxu0 0.0
        %1072 = vmatprep.subr.mxu0 0.0
        %1073 = vmatpush1.xpose.msra.mxu0 0.0
        %1074 = vmatprep.subr.mxu0 0.0
        %1075 = vmatpush1.xpose.msra.mxu0 %v965
        %1076 = vmatprep.subr.mxu0 0.0
        %1077 = vmatpush2.xpose.msra.mxu0 0.0
        %1078 = vmatprep.subr.mxu0 0.0
        %1079 = vmatpush2.xpose.msra.mxu0 0.0
        %1080 = vmatprep.subr.mxu0 0.0
        %1081 = vmatpush2.xpose.msra.mxu0 0.0
        %1082 = vmatprep.subr.mxu0 0.0
        %1083 = vmatpush2.xpose.msra.mxu0 0.0
        %1084 = vmatprep.subr.mxu0 0.0
        %1085 = vmatpush2.xpose.msra.mxu0 0.0
        %1086 = vmatprep.subr.mxu0 0.0
        %1087 = vmatpush2.xpose.msra.mxu0 0.0
        %1088 = vmatprep.subr.mxu0 0.0
        %1089 = vmatpush2.xpose.msra.mxu0 0.0
        %1090 = vmatprep.subr.mxu0 0.0
        %1091 = vmatpush2.xpose.msra.mxu0 0.0
        %1092 = vmatprep.subr.mxu0 0.0
        %1093 = vmatpush2.xpose.msra.mxu0 0.0
        %1094 = vmatprep.subr.mxu0 0.0
        %1095 = vmatpush2.xpose.msra.mxu0 0.0
        %1096 = vmatprep.subr.mxu0 0.0
        %1097 = vmatpush2.xpose.msra.mxu0 0.0
        %1098 = vmatprep.subr.mxu0 0.0
        %1099 = vmatpush2.xpose.msra.mxu0 0.0
        %1100 = vmatprep.subr.mxu0 0.0
        %1101 = vmatpush2.xpose.msra.mxu0 0.0
        %1102 = vmatprep.subr.mxu0 0.0
        %1103 = vmatpush2.xpose.msra.mxu0 0.0
        %1104 = vmatprep.subr.mxu0 0.0
        %1105 = vmatpush2.xpose.msra.mxu0 0.0
        %1106 = vmatprep.subr.mxu0 0.0
        %1107 = vmatpush2.xpose.msra.mxu0 0.0
        %1108 = vmatprep.mubr.f32.mxu0 0.0
        %1109 = vmatmul.mubr.f32.gmra.mxu0 %v1042
        %v1110 = vpop.f32.mrf.mxu0
        %v1111 = vadd.f32 0.0, %v1110
        %v1112 = vpop.f32.mrf.mxu0
        %1113 = vdwg.mxu0
        %1115 = vset.pattern.permute.xlu0 0
        %1116 = vperm.xlu0 %1115, %v1037
        %v1117 = vpop.permute.xlu0 %1116
        %v1119 = vlaneseq
        %v1120 = vshrl.u32 %v1119, 7
        %v1121 = vsub.s32 0, %v1120
        %v1122 = vrot.slane %v1111, %v1121
        %v1123 = vadd.f32 %v1117, %v1122
        %vm1124 = vcmp.gt.f32.partialorder %v1123, 0.0
        %v1125 = vmul.f32 %v1123, 0.2
        %v1126 = vsel %vm1124, %v1123, %v1125
        %v1127 = vsel %vm415, %v1126, -9e+15
        %v1128 = vsel %vm548, %v1127, -inf
        %1129 = vmax.xlane.f32.xlu0 %v1128
        %v1130 = vpop.xlane.xlu0 %1129
        %v1131 = vsub.f32 %v1127, %v1130
        %v1132 = vmul.f32 %v1131, 1.442695
        %v1133 = vpow.pop %v1132
        %v1134 = vpack.c.bf16 %v957, %v957
        %v1136 = vsel %vm963, %v1134, 1065369472
        %v1137 = vpack.c.bf16 %v1133, %v1133
        %v1139 = vsel %vm548, %v1137, 0
        %v1141 = vsel %vm652, %v1136, 0
        %1143 = vmatprep.subr.bf16.mxu0 0
        %1144 = vmatpush1.bf16.msra.mxu0 0
        %1145 = vmatprep.subr.bf16.mxu0 0
        %1146 = vmatpush1.bf16.msra.mxu0 0
        %1147 = vmatprep.subr.bf16.mxu0 0
        %1148 = vmatpush1.bf16.msra.mxu0 0
        %1149 = vmatprep.subr.bf16.mxu0 0
        %1150 = vmatpush1.bf16.msra.mxu0 0
        %1151 = vmatprep.subr.bf16.mxu0 0
        %1152 = vmatpush1.bf16.msra.mxu0 0
        %1153 = vmatprep.subr.bf16.mxu0 0
        %1154 = vmatpush1.bf16.msra.mxu0 0
        %1155 = vmatprep.subr.bf16.mxu0 0
        %1156 = vmatpush1.bf16.msra.mxu0 0
        %1157 = vmatprep.subr.bf16.mxu0 0
        %1158 = vmatpush1.bf16.msra.mxu0 %v1141
        %1159 = vmatprep.subr.bf16.mxu0 0
        %1160 = vmatpush2.bf16.msra.mxu0 0
        %1161 = vmatprep.subr.bf16.mxu0 0
        %1162 = vmatpush2.bf16.msra.mxu0 0
        %1163 = vmatprep.subr.bf16.mxu0 0
        %1164 = vmatpush2.bf16.msra.mxu0 0
        %1165 = vmatprep.subr.bf16.mxu0 0
        %1166 = vmatpush2.bf16.msra.mxu0 0
        %1167 = vmatprep.subr.bf16.mxu0 0
        %1168 = vmatpush2.bf16.msra.mxu0 0
        %1169 = vmatprep.subr.bf16.mxu0 0
        %1170 = vmatpush2.bf16.msra.mxu0 0
        %1171 = vmatprep.subr.bf16.mxu0 0
        %1172 = vmatpush2.bf16.msra.mxu0 0
        %1173 = vmatprep.subr.bf16.mxu0 0
        %1174 = vmatpush2.bf16.msra.mxu0 0
        %1175 = vmatprep.mubr.bf16.mxu0 0
        %1176 = vmatmul.mubr.bf16.gmra.mxu0 %v1139
        %v1177 = vpop.f32.mrf.mxu0
        %v1178 = vadd.f32 0.0, %v1177
        %v1179 = vpop.f32.mrf.mxu0
        %v1180 = vpop.f32.mrf.mxu0
        %v1181 = vpop.f32.mrf.mxu0
        %1182 = vdwg.mxu0
        %v1183 = vrcp.pop %v1178
        %1185 = vset.pattern.permute.xlu0 4
        %1186 = vperm.xlu0 %1185, %v1183
        %v1187 = vpop.permute.xlu0 %1186
        %v1189 = vmul.f32 %v1178, %v1187
        %vm1190 = vcmp.gt.f32.partialorder %v1189, 0.0
        %v1191 = vmin.f32 %v1189, 0.0
        %v1192 = vmul.f32 %v1191, 1.442695
        %v1193 = vpow.pop %v1192
        %v1194 = vsub.f32 %v1193, 1.0
        %v1195 = vsel %vm1190, %v1189, %v1194
        %v1196 = vsel %vm963, %v1195, -inf
        %1197 = vmax.xlane.f32.xlu0 %v1196
        %v1198 = vpop.xlane.xlu0 %1197
        %v1199 = vsub.f32 %v1195, %v1198
        %v1200 = vmul.f32 %v1199, 1.442695
        %v1201 = vpow.pop %v1200
        %v1202 = vsel %vm963, %v1201, 0.0
        %1203 = vadd.xlane.f32.xlu0 %v1202
        %v1204 = vpop.xlane.xlu0 %1203
        %v1205 = vlog2.pop %v1204
        %v1206 = vmul.f32 %v1205, 0.6931472
        %v1207 = vadd.f32 %v1206, %v1198
        %v1208 = vsub.f32 %v1195, %v1207
        %1209 = vst.msk [vmem:[%s411] sm:$0xff] %vm963, %v1208
        %p1210 = scmp.lt.s32.totalorder %s27, 1
        %s1211 = scalar_select %p1210, %s27, 1
        %s1212 = smul.addr %s1211, 8
        %s1213 = scalar_lea.vmem %s8, %s1212
        // Predicated region
        $region77: #{gat_forward.1} parent=51 // pred_check
          %p1214 = pneg %p223
        $region78: #{gat_forward.1} parent=51 // pred_check_branch
          %1216 = sbr.rel (%p1214) target = $region80
        $region79: #{gat_forward.1} parent=51 // pred_region
          _
        $region80: #{gat_forward.1} parent=51 // pred_fallthru
          _
      $region52: #{gat_forward.1} parent=5 // pred_fallthru
        _
      %p1217 = scmp.le.s32.totalorder 2, %s22
      // Predicated region
      $region81: #{gat_forward.1} parent=5 // pred_check
        %p1218 = pneg %p1217
      $region82: #{gat_forward.1} parent=5 // pred_check_branch
        %1220 = sbr.rel (%p1218) target = $region84
      $region83: #{gat_forward.1} parent=5 // pred_region
        %s1221 = ssub.s32 %s22, 2
        // Predicated region
        $region85: #{gat_forward.1} parent=83 // pred_check
          %p1222 = pneg %p229
        $region86: #{gat_forward.1} parent=83 // pred_check_branch
          %1224 = sbr.rel (%p1222) target = $region88
        $region87: #{gat_forward.1} parent=83 // pred_region
          %p1225 = scmp.lt.s32.totalorder %s28, 1
          %s1226 = scalar_select %p1225, %s28, 1
          %s1227 = smul.addr %s1226, 8
          %s1228 = scalar_lea.vmem %s8, %s1227
        $region88: #{gat_forward.1} parent=83 // pred_fallthru
          _
      $region84: #{gat_forward.1} parent=5 // pred_fallthru
        _
    $region6: #{gat_forward.1} parent=1 // loop_footer
      %s26 = sadd.s32 1, %s22
    $region7: #{gat_forward.1} parent=1 // loop_footer_branch
      %21 = sbr.rel target = $region3
    $region8: #{gat_forward.1} parent=1 // loop_exit
      _
    %1229 = vsyncpa [#allocation3], 1
    %s1230 = scalar_lea.sflag [#allocation3], 1
    %1231 = vsyncpa %s1230, 1
    %1232 = vsyncpa [#allocation5], 1
    %s1233 = scalar_lea.sflag [#allocation5], 1
    %1234 = vsyncpa %s1233, 1
    %1235 = vsyncpa [#allocation8], 1
    %1236 = vsyncpa [#allocation11], 1

</llo_original>
